<compile_context>
chip_gen: v5e
topology: v5e:2x2
jax: 0.10.0
libtpu: 0.0.40
codegen_flags: <defaults>
</compile_context>

<pallas_src>
import math
import numpy as np
import jax
import jax.numpy as jnp
from jax.experimental import pallas as pl
from jax.experimental.pallas import tpu as pltpu


def _adv_net_kernel(x_ref, w1_ref, b1_ref, w2_ref, b2_ref, w3_ref, b3_ref, y_ref):
    # x_ref : (TB, IN)   f32  -- one batch tile in natural [batch, feature] layout
    # w1_ref: (IN, H_p)  bf16 (W1^T), w2_ref: (H_p, H_p) bf16 (W2^T), w3_ref: (1, H_p) bf16
    # b1_ref/b2_ref: (1, H_p) f32 (VMEM);  b3_ref: (1, 1) f32 (SMEM scalar)
    # y_ref : (TB, 1)    f32
    x = x_ref[...].astype(w1_ref.dtype)          # bf16 cast happens in-kernel (VPU)

    # layer 1: MXU matmul, f32 accumulation; bias + ReLU in f32 on the VPU.
    h1 = jnp.dot(x, w1_ref[...], preferred_element_type=jnp.float32)        # (TB, H_p)
    h1 = jnp.maximum(h1 + b1_ref[...], 0.0)      # relu1 (dropout1 = identity in eval)

    # layer 2: cast the activation to the MXU dtype only at the dot input.
    h2 = jnp.dot(h1.astype(w2_ref.dtype), w2_ref[...],
                 preferred_element_type=jnp.float32)                         # (TB, H_p)
    h2 = jnp.maximum(h2 + b2_ref[...], 0.0)      # relu2 (dropout2 = identity in eval)

    # layer 3 (out_features == 1): VPU multiply + XLU cross-lane reduction instead of
    # an N=1 MXU matmul.
    logits = jnp.sum(h2 * w3_ref[...].astype(jnp.float32), axis=-1, keepdims=True)
    logits = logits + b3_ref[0, 0]

    # exact sigmoid (exp on the EUP); logits are only (TB, 1) so this is cheap.
    y_ref[...] = (1.0 / (1.0 + jnp.exp(-logits))).astype(y_ref.dtype)


def _round_up(n, m):
    return ((n + m - 1) // m) * m


def _pad2(a, rows, cols):
    pr, pc = rows - a.shape[0], cols - a.shape[1]
    return jnp.pad(a, ((0, pr), (0, pc))) if (pr or pc) else a


def adversarial_network_forward(x, params, *, batch_tile=2048,
                                compute_dtype=jnp.bfloat16,
                                vmem_budget_bytes=12 * 1024 * 1024):
    """x: [B, in_feature] f32.  params in native PyTorch layout:
       w1 [H, IN], b1 [H], w2 [H, H], b2 [H], w3 [1, H], b3 [1]."""
    B, IN = x.shape
    H = params["w1"].shape[0]
    H_p = _round_up(H, 128)

    # ---- adaptive batch tile -------------------------------------------------
    TB_cap = max(128, _round_up(batch_tile, 128))
    # VMEM estimate per batch row: double-buffered f32 x tile + f32 h1/h2/logit temps.
    itemsize = jnp.dtype(compute_dtype).itemsize
    weight_bytes = 2 * (IN * H_p + H_p * H_p + H_p) * itemsize + 2 * (2 * H_p + 1) * 4
    per_row_bytes = 2 * IN * 4 + 3 * H_p * 4 + 2 * 4
    TB_budget = max(128, (vmem_budget_bytes - weight_bytes) // per_row_bytes // 128 * 128)
    TB = min(TB_cap, TB_budget, _round_up(B, 128))
    # Keep >= 2 grid steps when the batch allows it, so ("parallel",) can use both
    # TensorCores on v7x (no-op on single-TC v5e / v6e).
    if B > 128 and pl.cdiv(B, TB) < 2:
        TB = max(128, _round_up(pl.cdiv(B, 2), 128))
    grid = (pl.cdiv(B, TB),)

    # ---- tiny weight/bias tensors: pad / transpose / cast in the wrapper -----
    w1t = _pad2(params["w1"].T, IN, H_p).astype(compute_dtype)               # (IN, H_p)
    w2t = _pad2(params["w2"].T, H_p, H_p).astype(compute_dtype)              # (H_p, H_p)
    w3r = _pad2(params["w3"], 1, H_p).astype(compute_dtype)                  # (1, H_p)
    b1 = _pad2(params["b1"].reshape(1, -1).astype(jnp.float32), 1, H_p)      # (1, H_p)
    b2 = _pad2(params["b2"].reshape(1, -1).astype(jnp.float32), 1, H_p)      # (1, H_p)
    b3 = params["b3"].reshape(1, 1).astype(jnp.float32)                      # (1, 1) SMEM

    const = lambda i: (0, 0)   # weights / biases stay VMEM-resident across batch tiles

    y = pl.pallas_call(
        _adv_net_kernel,
        out_shape=jax.ShapeDtypeStruct((B, 1), jnp.float32),
        grid=grid,
        in_specs=[
            pl.BlockSpec((TB, IN), lambda i: (i, 0)),             # x tile (pipelined)
            pl.BlockSpec((IN, H_p), const),                       # W1^T
            pl.BlockSpec((1, H_p), const),                        # b1
            pl.BlockSpec((H_p, H_p), const),                      # W2^T
            pl.BlockSpec((1, H_p), const),                        # b2
            pl.BlockSpec((1, H_p), const),                        # w3 row
            pl.BlockSpec(memory_space=pltpu.MemorySpace.SMEM),    # b3 scalar
        ],
        out_specs=pl.BlockSpec((TB, 1), lambda i: (i, 0)),
        compiler_params=pltpu.CompilerParams(
            dimension_semantics=("parallel",)),                   # v7x: 2 TCs
    )(x, w1t, b1, w2t, b2, w3r, b3)

    return y                                                      # [B, 1] f32


def init_params(key, in_feature, hidden_size):
    """Xavier-normal weights, zero biases (matches init_weights for nn.Linear).
    Stored in native PyTorch [out, in] layout."""
    k1, k2, k3 = jax.random.split(key, 3)

    def xavier_normal(k, out_f, in_f):
        std = math.sqrt(2.0 / (in_f + out_f))
        return (std * jax.random.normal(k, (out_f, in_f))).astype(jnp.float32)

    return {
        "w1": xavier_normal(k1, hidden_size, in_feature),
        "b1": jnp.zeros((hidden_size,), jnp.float32),
        "w2": xavier_normal(k2, hidden_size, hidden_size),
        "b2": jnp.zeros((hidden_size,), jnp.float32),
        "w3": xavier_normal(k3, 1, hidden_size),
        "b3": jnp.zeros((1,), jnp.float32),
    }


def calc_coeff(iter_num, high=1.0, low=0.0, alpha=10.0, max_iter=10000.0):
    # Forward-pass value is unaffected by coeff (it only scales the reversed
    # gradient); computed here for parity with the reference module.
    # TODO(synk): grl_hook (gradient reversal) is backward-only; no forward equivalent.
    return float(2.0 * (high - low) / (1.0 + np.exp(-alpha * iter_num / max_iter))
                 - (high - low) + low)


if __name__ == "__main__":
    B, IN_FEATURE, HIDDEN = 200, 256, 128   # B deliberately not a multiple of 128

    key = jax.random.PRNGKey(0)
    kx, kp = jax.random.split(key)
    x = jax.random.normal(kx, (B, IN_FEATURE), dtype=jnp.float32)
    params = init_params(kp, IN_FEATURE, HIDDEN)

    _ = calc_coeff(0.0)  # iter_num = 0 at init

    y = adversarial_network_forward(x, params)
    y = jax.block_until_ready(y)

    # Pure-JAX reference using the same bf16 matmul inputs / f32 accumulation.
    cd = jnp.bfloat16
    h1 = jnp.maximum(
        jnp.dot(x.astype(cd), params["w1"].T.astype(cd),
                preferred_element_type=jnp.float32) + params["b1"], 0.0)
    h2 = jnp.maximum(
        jnp.dot(h1.astype(cd), params["w2"].T.astype(cd),
                preferred_element_type=jnp.float32) + params["b2"], 0.0)
    logits = jnp.sum(h2 * params["w3"][0].astype(cd).astype(jnp.float32),
                     axis=-1, keepdims=True) + params["b3"]
    y_ref = 1.0 / (1.0 + jnp.exp(-logits))

    assert y.shape == (B, 1)
    max_err = float(jnp.max(jnp.abs(y - y_ref)))
    assert jnp.allclose(y, y_ref, atol=2e-2, rtol=1e-2), f"max_err={max_err}"

    print("KERNEL_OK")
</pallas_src>

<mosaic_0001>
module attributes {stable_mosaic.version = 11 : i64} {
  func.func @_adv_net_kernel(%arg0: i32, %arg1: memref<128x256xf32, #tpu.memory_space<vmem>>, %arg2: memref<256x128xbf16, #tpu.memory_space<vmem>>, %arg3: memref<1x128xf32, #tpu.memory_space<vmem>>, %arg4: memref<128x128xbf16, #tpu.memory_space<vmem>>, %arg5: memref<1x128xf32, #tpu.memory_space<vmem>>, %arg6: memref<1x128xbf16, #tpu.memory_space<vmem>>, %arg7: memref<1x1xf32, #tpu.memory_space<smem>>, %arg8: memref<128x1xf32, #tpu.memory_space<vmem>>) attributes {dimension_semantics = [#tpu.dimension_semantics<parallel>], iteration_bounds = array<i64: 2>, scalar_prefetch = 0 : i64, scratch_operands = 0 : i64, tpu.core_type = #tpu.core_type<tc>, window_params = [{transform_indices = @transform_0, window_bounds = array<i64: 128, 256>}, {pipeline_mode = #tpu.pipeline_mode<synchronous>, transform_indices = @transform_1, window_bounds = array<i64: 256, 128>}, {pipeline_mode = #tpu.pipeline_mode<synchronous>, transform_indices = @transform_2, window_bounds = array<i64: 1, 128>}, {pipeline_mode = #tpu.pipeline_mode<synchronous>, transform_indices = @transform_3, window_bounds = array<i64: 128, 128>}, {pipeline_mode = #tpu.pipeline_mode<synchronous>, transform_indices = @transform_4, window_bounds = array<i64: 1, 128>}, {pipeline_mode = #tpu.pipeline_mode<synchronous>, transform_indices = @transform_5, window_bounds = array<i64: 1, 128>}, {transform_indices = @transform_6, window_bounds = array<i64: 1, 1>}, {transform_indices = @transform_7, window_bounds = array<i64: 128, 1>}]} {
    %c0 = arith.constant 0 : index
    %c0_0 = arith.constant 0 : index
    %0 = vector.load %arg1[%c0, %c0_0] : memref<128x256xf32, #tpu.memory_space<vmem>>, vector<128x256xf32>
    %1 = arith.truncf %0 : vector<128x256xf32> to vector<128x256xbf16>
    %c0_1 = arith.constant 0 : index
    %c0_2 = arith.constant 0 : index
    %2 = vector.load %arg2[%c0_1, %c0_2] : memref<256x128xbf16, #tpu.memory_space<vmem>>, vector<256x128xbf16>
    %cst = arith.constant dense<0.000000e+00> : vector<128x128xf32>
    %3 = tpu.matmul %1, %2, %cst {dimension_numbers = #tpu.dot_dimension_numbers<[1], [0], [0], [1], [0, 0, 1, 1], [], []>} : vector<128x256xbf16>, vector<256x128xbf16>, vector<128x128xf32> -> vector<128x128xf32>
    %c0_3 = arith.constant 0 : index
    %c0_4 = arith.constant 0 : index
    %4 = vector.load %arg3[%c0_3, %c0_4] : memref<1x128xf32, #tpu.memory_space<vmem>>, vector<1x128xf32>
    %5 = vector.broadcast %4 : vector<1x128xf32> to vector<128x128xf32>
    %6 = arith.addf %3, %5 : vector<128x128xf32>
    %cst_5 = arith.constant 0.000000e+00 : f32
    %7 = vector.broadcast %cst_5 : f32 to vector<128x128xf32>
    %8 = arith.maximumf %6, %7 : vector<128x128xf32>
    %9 = arith.truncf %8 : vector<128x128xf32> to vector<128x128xbf16>
    %c0_6 = arith.constant 0 : index
    %c0_7 = arith.constant 0 : index
    %10 = vector.load %arg4[%c0_6, %c0_7] : memref<128x128xbf16, #tpu.memory_space<vmem>>, vector<128x128xbf16>
    %cst_8 = arith.constant dense<0.000000e+00> : vector<128x128xf32>
    %11 = tpu.matmul %9, %10, %cst_8 {dimension_numbers = #tpu.dot_dimension_numbers<[1], [0], [0], [1], [0, 0, 1, 1], [], []>} : vector<128x128xbf16>, vector<128x128xbf16>, vector<128x128xf32> -> vector<128x128xf32>
    %c0_9 = arith.constant 0 : index
    %c0_10 = arith.constant 0 : index
    %12 = vector.load %arg5[%c0_9, %c0_10] : memref<1x128xf32, #tpu.memory_space<vmem>>, vector<1x128xf32>
    %13 = vector.broadcast %12 : vector<1x128xf32> to vector<128x128xf32>
    %14 = arith.addf %11, %13 : vector<128x128xf32>
    %cst_11 = arith.constant 0.000000e+00 : f32
    %15 = vector.broadcast %cst_11 : f32 to vector<128x128xf32>
    %16 = arith.maximumf %14, %15 : vector<128x128xf32>
    %c0_12 = arith.constant 0 : index
    %c0_13 = arith.constant 0 : index
    %17 = vector.load %arg6[%c0_12, %c0_13] : memref<1x128xbf16, #tpu.memory_space<vmem>>, vector<1x128xbf16>
    %18 = arith.extf %17 : vector<1x128xbf16> to vector<1x128xf32>
    %19 = vector.broadcast %18 : vector<1x128xf32> to vector<128x128xf32>
    %20 = arith.mulf %16, %19 : vector<128x128xf32>
    %cst_14 = arith.constant dense<0.000000e+00> : vector<128xf32>
    %21 = vector.multi_reduction <add>, %20, %cst_14 [1] : vector<128x128xf32> to vector<128xf32>
    %22 = vector.shape_cast %21 : vector<128xf32> to vector<128x1xf32>
    %c0_15 = arith.constant 0 : index
    %c0_16 = arith.constant 0 : index
    %23 = memref.load %arg7[%c0_15, %c0_16] : memref<1x1xf32, #tpu.memory_space<smem>>
    %24 = vector.broadcast %23 : f32 to vector<128x1xf32>
    %25 = arith.addf %22, %24 : vector<128x1xf32>
    %cst_17 = arith.constant 0.000000e+00 : f32
    %26 = vector.broadcast %cst_17 : f32 to vector<128x1xf32>
    %27 = arith.subf %26, %25 : vector<128x1xf32>
    %28 = math.exp %27 : vector<128x1xf32>
    %cst_18 = arith.constant 1.000000e+00 : f32
    %29 = vector.broadcast %cst_18 : f32 to vector<128x1xf32>
    %30 = arith.addf %29, %28 : vector<128x1xf32>
    %cst_19 = arith.constant 1.000000e+00 : f32
    %31 = vector.broadcast %cst_19 : f32 to vector<128x1xf32>
    %32 = arith.divf %31, %30 : vector<128x1xf32>
    %c0_20 = arith.constant 0 : index
    %c0_21 = arith.constant 0 : index
    %33 = vector.load %arg8[%c0_20, %c0_21] : memref<128x1xf32, #tpu.memory_space<vmem>>, vector<128x1xf32>
    tpu.vector_store %arg8[%c0_20, %c0_21], %32 {strides = array<i32>} : memref<128x1xf32, #tpu.memory_space<vmem>>, vector<128x1xf32>,
    return
  }
  func.func @transform_0(%arg0: i32) -> (i32, i32) {
    %c0_i32 = arith.constant 0 : i32
    %c0_i32_0 = arith.constant 0 : i32
    return %arg0, %c0_i32 : i32, i32
  }
  func.func @transform_1(%arg0: i32) -> (i32, i32) {
    %c0_i32 = arith.constant 0 : i32
    %c0_i32_0 = arith.constant 0 : i32
    %c0_i32_1 = arith.constant 0 : i32
    return %c0_i32, %c0_i32_0 : i32, i32
  }
  func.func @transform_2(%arg0: i32) -> (i32, i32) {
    %c0_i32 = arith.constant 0 : i32
    %c0_i32_0 = arith.constant 0 : i32
    %c0_i32_1 = arith.constant 0 : i32
    return %c0_i32, %c0_i32_0 : i32, i32
  }
  func.func @transform_3(%arg0: i32) -> (i32, i32) {
    %c0_i32 = arith.constant 0 : i32
    %c0_i32_0 = arith.constant 0 : i32
    %c0_i32_1 = arith.constant 0 : i32
    return %c0_i32, %c0_i32_0 : i32, i32
  }
  func.func @transform_4(%arg0: i32) -> (i32, i32) {
    %c0_i32 = arith.constant 0 : i32
    %c0_i32_0 = arith.constant 0 : i32
    %c0_i32_1 = arith.constant 0 : i32
    return %c0_i32, %c0_i32_0 : i32, i32
  }
  func.func @transform_5(%arg0: i32) -> (i32, i32) {
    %c0_i32 = arith.constant 0 : i32
    %c0_i32_0 = arith.constant 0 : i32
    %c0_i32_1 = arith.constant 0 : i32
    return %c0_i32, %c0_i32_0 : i32, i32
  }
  func.func @transform_6(%arg0: i32) -> (i32, i32) {
    %c0_i32 = arith.constant 0 : i32
    %c0_i32_0 = arith.constant 0 : i32
    %c0_i32_1 = arith.constant 0 : i32
    return %c0_i32, %c0_i32_0 : i32, i32
  }
  func.func @transform_7(%arg0: i32) -> (i32, i32) {
    %c0_i32 = arith.constant 0 : i32
    %c0_i32_0 = arith.constant 0 : i32
    return %arg0, %c0_i32 : i32, i32
  }
}

</mosaic_0001>

<llo_original>
// kernel: tpu_custom_call.1
$region0: #{tpu_custom_call.1}
  #allocation0 [shape = 'u32[]', space=smem, size = 0x4, offset = 0x4, fixed_abs, tag = 'smem constant byte address 0x4 - core index']
  #allocation1 [shape = 'u32[72,128]{1,0:T(1,128)}', space=vmem, size = 0x9000, scoped, tag = 'internal scratch']
  #allocation2 [shape = 'f32[1,1]{1,0:T(1,128)S(6)}', space=smem, size = 0x200, scoped, tag = 'scoped memory for tpu_custom_call.1']
  %s0 = inlined_call_operand.hbm [shape: f32[200,256], index: 0, kind: input, shape index: {}]
  %s1 = inlined_call_operand.hbm [shape: bf16[256,128], index: 1, kind: input, shape index: {}]
  %s2 = inlined_call_operand.vmem [shape: f32[1,128], index: 2, kind: input, shape index: {}]
  %s3 = inlined_call_operand.hbm [shape: bf16[128,128], index: 3, kind: input, shape index: {}]
  %s4 = inlined_call_operand.vmem [shape: f32[1,128], index: 4, kind: input, shape index: {}]
  %s5 = inlined_call_operand.vmem [shape: bf16[1,128], index: 5, kind: input, shape index: {}]
  %s6 = inlined_call_operand.<no memory space> [shape: f32[1,1], index: 6, kind: input, shape index: {}]
  %s7 = inlined_call_operand.vmem [shape: f32[200,1], index: 7, kind: output, shape index: {}]
  %s8 = sld [smem:[#allocation0]]
  $region121: #{tpu_custom_call.1} parent=0
    _
  %s10 = ssub.s32 1, %s8
  %s11 = scalar_select 0, %s10, %s8
  %12 = sst [smem:[#allocation2]] %s6
  $region1: #{tpu_custom_call.1} parent=0
    #allocation3 [shape = 'u8[262144]{0}', space=vmem, size = 0x40000, scoped, tag = 'input window, operand 0']
    #allocation4 [shape = 's32[2]{0}', space=sflag, size = 0x8, scoped, tag = 'scoped memory for tpu_custom_call.1']
    #allocation5 [shape = 'u8[65536]{0}', space=vmem, size = 0x10000, scoped, tag = 'input window, operand 1, single buffered']
    #allocation6 [shape = 's32[1]{0}', space=sflag, size = 0x4, scoped, tag = 'scoped memory for tpu_custom_call.1']
    #allocation7 [shape = 'u8[32768]{0}', space=vmem, size = 0x8000, scoped, tag = 'input window, operand 3, single buffered']
    #allocation8 [shape = 'u8[131072]{0}', space=vmem, size = 0x20000, scoped, tag = 'output window, operand 0']
    %13 = vsyncpa [#allocation4], 0
    %s14 = scalar_lea.sflag [#allocation4], 1
    %15 = vsyncpa %s14, 0
    %16 = vsyncpa [#allocation6], 0
    loop: start=0, step=1, limit=4
    $region2: #{tpu_custom_call.1} parent=1 // loop_pre_header
      _
    $region3: #{tpu_custom_call.1} parent=1 // loop_header
      %s18 = sphi 0, %s22
      %p19 = scmp.ge.s32.totalorder %s18, 4
      %s28 = sphi 0, %s30
      %s31 = sphi 0, %s28
      %s32 = sphi 0, %s31
      %s48 = sphi 0, %s32
      %s52 = sphi 0, %s52
      %s54 = sphi 0, %s52
      %s55 = sphi 0, %s54
      %s69 = sphi 0, %s55
      %s73 = sphi 0, %s73
      %s75 = sphi 0, %s73
      %s76 = sphi 0, %s75
      %s90 = sphi 0, %s76
      %s94 = sphi 0, %s94
      %s96 = sphi 0, %s94
      %s97 = sphi 0, %s96
      %s111 = sphi 0, %s97
      %s115 = sphi 0, %s115
      %s117 = sphi 0, %s115
      %s118 = sphi 0, %s117
      %s132 = sphi 0, %s118
      %s136 = sphi 0, %s136
      %s138 = sphi 0, %s136
      %s139 = sphi 0, %s138
      %s153 = sphi 0, %s139
      %s157 = sphi 0, %s157
      %s159 = sphi 0, %s157
      %s160 = sphi 0, %s159
      %s174 = sphi 0, %s160
      %s180 = sphi 0, %s182
      %s183 = sphi 0, %s180
      %s184 = sphi 0, %s183
      %s200 = sphi 0, %s184
    $region4: #{tpu_custom_call.1} parent=1 // loop_header_branch
      %21 = sbr.rel (%p19) target = $region8
    $region5: #{tpu_custom_call.1} parent=1 // loop_body
      %s23 = ssub.s32 %s18, 1
      %s24 = ssub.s32 %s18, 2
      %s25 = sadd.s32 %s18, 1
      %s26 = ssub.s32 %s18, %s25
      %p27 = scmp.eq.s32.totalorder %s26, 0
      %s29 = sadd.s32 %s28, 1
      %s30 = scalar_select %p27, %s28, %s29
      %p33 = pneg %p27
      %p34 = scmp.eq.s32.totalorder %s18, 1
      %p35 = por %p33, %p34
      %p36 = scmp.ne.s32.totalorder %s28, %s31
      %p37 = scmp.eq.s32.totalorder %s18, 0
      %p38 = por %p36, %p37
      %p39 = scmp.ne.s32.totalorder %s28, %s31
      %p40 = scmp.eq.s32.totalorder %s23, 1
      %p41 = por %p39, %p40
      %p42 = scmp.ne.s32.totalorder %s31, %s32
      %p43 = scmp.eq.s32.totalorder %s23, 0
      %p44 = por %p42, %p43
      %p45 = scmp.ne.s32.totalorder %s31, %s32
      %p46 = scmp.eq.s32.totalorder %s24, 1
      %p47 = por %p45, %p46
      %p49 = scmp.ne.s32.totalorder %s32, %s48
      %p50 = scmp.eq.s32.totalorder %s24, 0
      %p51 = por %p49, %p50
      %s53 = sadd.s32 %s52, 1
      %p56 = scmp.eq.s32.totalorder %s18, 1
      %p57 = scmp.ne.s32.totalorder %s52, %s54
      %p58 = scmp.eq.s32.totalorder %s18, 0
      %p59 = por %p57, %p58
      %p60 = scmp.ne.s32.totalorder %s52, %s54
      %p61 = scmp.eq.s32.totalorder %s23, 1
      %p62 = por %p60, %p61
      %p63 = scmp.ne.s32.totalorder %s54, %s55
      %p64 = scmp.eq.s32.totalorder %s23, 0
      %p65 = por %p63, %p64
      %p66 = scmp.ne.s32.totalorder %s54, %s55
      %p67 = scmp.eq.s32.totalorder %s24, 1
      %p68 = por %p66, %p67
      %p70 = scmp.ne.s32.totalorder %s55, %s69
      %p71 = scmp.eq.s32.totalorder %s24, 0
      %p72 = por %p70, %p71
      %s74 = sadd.s32 %s73, 1
      %p77 = scmp.eq.s32.totalorder %s18, 1
      %p78 = scmp.ne.s32.totalorder %s73, %s75
      %p79 = scmp.eq.s32.totalorder %s18, 0
      %p80 = por %p78, %p79
      %p81 = scmp.ne.s32.totalorder %s73, %s75
      %p82 = scmp.eq.s32.totalorder %s23, 1
      %p83 = por %p81, %p82
      %p84 = scmp.ne.s32.totalorder %s75, %s76
      %p85 = scmp.eq.s32.totalorder %s23, 0
      %p86 = por %p84, %p85
      %p87 = scmp.ne.s32.totalorder %s75, %s76
      %p88 = scmp.eq.s32.totalorder %s24, 1
      %p89 = por %p87, %p88
      %p91 = scmp.ne.s32.totalorder %s76, %s90
      %p92 = scmp.eq.s32.totalorder %s24, 0
      %p93 = por %p91, %p92
      %s95 = sadd.s32 %s94, 1
      %p98 = scmp.eq.s32.totalorder %s18, 1
      %p99 = scmp.ne.s32.totalorder %s94, %s96
      %p100 = scmp.eq.s32.totalorder %s18, 0
      %p101 = por %p99, %p100
      %p102 = scmp.ne.s32.totalorder %s94, %s96
      %p103 = scmp.eq.s32.totalorder %s23, 1
      %p104 = por %p102, %p103
      %p105 = scmp.ne.s32.totalorder %s96, %s97
      %p106 = scmp.eq.s32.totalorder %s23, 0
      %p107 = por %p105, %p106
      %p108 = scmp.ne.s32.totalorder %s96, %s97
      %p109 = scmp.eq.s32.totalorder %s24, 1
      %p110 = por %p108, %p109
      %p112 = scmp.ne.s32.totalorder %s97, %s111
      %p113 = scmp.eq.s32.totalorder %s24, 0
      %p114 = por %p112, %p113
      %s116 = sadd.s32 %s115, 1
      %p119 = scmp.eq.s32.totalorder %s18, 1
      %p120 = scmp.ne.s32.totalorder %s115, %s117
      %p121 = scmp.eq.s32.totalorder %s18, 0
      %p122 = por %p120, %p121
      %p123 = scmp.ne.s32.totalorder %s115, %s117
      %p124 = scmp.eq.s32.totalorder %s23, 1
      %p125 = por %p123, %p124
      %p126 = scmp.ne.s32.totalorder %s117, %s118
      %p127 = scmp.eq.s32.totalorder %s23, 0
      %p128 = por %p126, %p127
      %p129 = scmp.ne.s32.totalorder %s117, %s118
      %p130 = scmp.eq.s32.totalorder %s24, 1
      %p131 = por %p129, %p130
      %p133 = scmp.ne.s32.totalorder %s118, %s132
      %p134 = scmp.eq.s32.totalorder %s24, 0
      %p135 = por %p133, %p134
      %s137 = sadd.s32 %s136, 1
      %p140 = scmp.eq.s32.totalorder %s18, 1
      %p141 = scmp.ne.s32.totalorder %s136, %s138
      %p142 = scmp.eq.s32.totalorder %s18, 0
      %p143 = por %p141, %p142
      %p144 = scmp.ne.s32.totalorder %s136, %s138
      %p145 = scmp.eq.s32.totalorder %s23, 1
      %p146 = por %p144, %p145
      %p147 = scmp.ne.s32.totalorder %s138, %s139
      %p148 = scmp.eq.s32.totalorder %s23, 0
      %p149 = por %p147, %p148
      %p150 = scmp.ne.s32.totalorder %s138, %s139
      %p151 = scmp.eq.s32.totalorder %s24, 1
      %p152 = por %p150, %p151
      %p154 = scmp.ne.s32.totalorder %s139, %s153
      %p155 = scmp.eq.s32.totalorder %s24, 0
      %p156 = por %p154, %p155
      %s158 = sadd.s32 %s157, 1
      %p161 = scmp.eq.s32.totalorder %s18, 1
      %p162 = scmp.ne.s32.totalorder %s157, %s159
      %p163 = scmp.eq.s32.totalorder %s18, 0
      %p164 = por %p162, %p163
      %p165 = scmp.ne.s32.totalorder %s157, %s159
      %p166 = scmp.eq.s32.totalorder %s23, 1
      %p167 = por %p165, %p166
      %p168 = scmp.ne.s32.totalorder %s159, %s160
      %p169 = scmp.eq.s32.totalorder %s23, 0
      %p170 = por %p168, %p169
      %p171 = scmp.ne.s32.totalorder %s159, %s160
      %p172 = scmp.eq.s32.totalorder %s24, 1
      %p173 = por %p171, %p172
      %p175 = scmp.ne.s32.totalorder %s160, %s174
      %p176 = scmp.eq.s32.totalorder %s24, 0
      %p177 = por %p175, %p176
      %s178 = ssub.s32 %s18, %s25
      %p179 = scmp.eq.s32.totalorder %s178, 0
      %s181 = sadd.s32 %s180, 1
      %s182 = scalar_select %p179, %s180, %s181
      %p185 = pneg %p179
      %p186 = scmp.eq.s32.totalorder %s18, 1
      %p187 = por %p185, %p186
      %p188 = scmp.ne.s32.totalorder %s180, %s183
      %p189 = scmp.eq.s32.totalorder %s18, 0
      %p190 = por %p188, %p189
      %p191 = scmp.ne.s32.totalorder %s180, %s183
      %p192 = scmp.eq.s32.totalorder %s23, 1
      %p193 = por %p191, %p192
      %p194 = scmp.ne.s32.totalorder %s183, %s184
      %p195 = scmp.eq.s32.totalorder %s23, 0
      %p196 = por %p194, %p195
      %p197 = scmp.ne.s32.totalorder %s183, %s184
      %p198 = scmp.eq.s32.totalorder %s24, 1
      %p199 = por %p197, %p198
      %p201 = scmp.ne.s32.totalorder %s184, %s200
      %p202 = scmp.eq.s32.totalorder %s24, 0
      %p203 = por %p201, %p202
      %p204 = scmp.le.s32.totalorder 1, %s18
      %p205 = scmp.lt.s32.totalorder %s18, 3
      %p206 = pnand %p204, %p205
      %p207 = pneg %p206
      // Predicated region
      $region9: #{tpu_custom_call.1} parent=5 // pred_check
        _
      $region10: #{tpu_custom_call.1} parent=5 // pred_check_branch
        %209 = sbr.rel (%p206) target = $region12
      $region11: #{tpu_custom_call.1} parent=5 // pred_region
        %s210 = ssub.s32 %s18, 1
        // Predicated region
        $region13: #{tpu_custom_call.1} parent=11 // pred_check
          %p211 = pneg %p65
        $region14: #{tpu_custom_call.1} parent=11 // pred_check_branch
          %213 = sbr.rel (%p211) target = $region16
        $region15: #{tpu_custom_call.1} parent=11 // pred_region
          %215 = vsyncadd [#allocation6], 0
          %s216 = sshll.u32 %s1, 4
          %s217 = int_to_ptr.hbm [resolvable:$true] %s216
          %s218 = sshll.u32 [#allocation5], 4
          %s219 = int_to_ptr.vmem [resolvable:$true] %s218
          %224 = dma.hbm_to_vmem [thread:$0]  %s217, 2048, %s219, [#allocation6], 64, 64, 4
        $region16: #{tpu_custom_call.1} parent=11 // pred_fallthru
          _
        // Predicated region
        $region17: #{tpu_custom_call.1} parent=11 // pred_check
          %p225 = pneg %p86
        $region18: #{tpu_custom_call.1} parent=11 // pred_check_branch
          %227 = sbr.rel (%p225) target = $region20
        $region19: #{tpu_custom_call.1} parent=11 // pred_region
          _
        $region20: #{tpu_custom_call.1} parent=11 // pred_fallthru
          _
        // Predicated region
        $region21: #{tpu_custom_call.1} parent=11 // pred_check
          %p228 = pneg %p107
        $region22: #{tpu_custom_call.1} parent=11 // pred_check_branch
          %230 = sbr.rel (%p228) target = $region24
        $region23: #{tpu_custom_call.1} parent=11 // pred_region
          %232 = vsyncadd [#allocation6], 0
          %s233 = sshll.u32 %s3, 4
          %s234 = int_to_ptr.hbm [resolvable:$true] %s233
          %s235 = sshll.u32 [#allocation7], 4
          %s236 = int_to_ptr.vmem [resolvable:$true] %s235
          %241 = dma.hbm_to_vmem [thread:$0]  %s234, 1024, %s236, [#allocation6], 64, 64, 4
        $region24: #{tpu_custom_call.1} parent=11 // pred_fallthru
          _
        // Predicated region
        $region25: #{tpu_custom_call.1} parent=11 // pred_check
          %p242 = pneg %p128
        $region26: #{tpu_custom_call.1} parent=11 // pred_check_branch
          %244 = sbr.rel (%p242) target = $region28
        $region27: #{tpu_custom_call.1} parent=11 // pred_region
          _
        $region28: #{tpu_custom_call.1} parent=11 // pred_fallthru
          _
        // Predicated region
        $region29: #{tpu_custom_call.1} parent=11 // pred_check
          %p245 = pneg %p149
        $region30: #{tpu_custom_call.1} parent=11 // pred_check_branch
          %247 = sbr.rel (%p245) target = $region32
        $region31: #{tpu_custom_call.1} parent=11 // pred_region
          _
        $region32: #{tpu_custom_call.1} parent=11 // pred_fallthru
          _
        // Predicated region
        $region33: #{tpu_custom_call.1} parent=11 // pred_check
          %p248 = pneg %p170
        $region34: #{tpu_custom_call.1} parent=11 // pred_check_branch
          %250 = sbr.rel (%p248) target = $region36
        $region35: #{tpu_custom_call.1} parent=11 // pred_region
          _
        $region36: #{tpu_custom_call.1} parent=11 // pred_fallthru
          _
      $region12: #{tpu_custom_call.1} parent=5 // pred_fallthru
        _
      %p251 = scmp.lt.s32.totalorder %s18, 2
      // Predicated region
      $region37: #{tpu_custom_call.1} parent=5 // pred_check
        %p252 = pneg %p251
      $region38: #{tpu_custom_call.1} parent=5 // pred_check_branch
        %254 = sbr.rel (%p252) target = $region40
      $region39: #{tpu_custom_call.1} parent=5 // pred_region
        // Predicated region
        $region41: #{tpu_custom_call.1} parent=39 // pred_check
          %p255 = pneg %p38
        $region42: #{tpu_custom_call.1} parent=39 // pred_check_branch
          %257 = sbr.rel (%p255) target = $region44
        $region43: #{tpu_custom_call.1} parent=39 // pred_region
          %s258 = sand.u32 %s28, 1
          %s259 = scalar_lea.sflag [#allocation4], %s258
          %s260 = sand.u32 %s28, 1
          %s261 = smul.addr %s260, 256
          %s262 = scalar_lea.vmem [#allocation3], %s261
          %s263 = smul.u32 16, %s18
          %s264 = ssub.s32 25, %s263
          %p265 = scmp.lt.s32.totalorder %s264, 16
          %s266 = scalar_select %p265, %s264, 16
          %s267 = smul.u32 8, %s266
          %s268 = smul.u32 %s267, 2
          %s269 = ssub.s32 256, %s268
          %s270 = sshll.u32 %s269, 4
          %271 = vsyncadd %s259, %s270
          %p272 = scmp.ne.s32.totalorder 0, %s268
          %s273 = smul.addr %s263, 2
          %s274 = smul.addr %s273, 8
          %s275 = scalar_lea.hbm %s0, %s274
          %s276 = smul.u32 16, %s266
          %s277 = sshll.u32 %s275, 4
          %s278 = int_to_ptr.hbm [resolvable:$true] %s277
          %s279 = sshll.u32 %s262, 4
          %s280 = int_to_ptr.vmem [resolvable:$true] %s279
          %s281 = sshll.u32 %s276, 4
          %285 = dma.hbm_to_vmem [thread:$0]  (%p272), %s278, %s281, %s280, %s259, 256, 256, 16
        $region44: #{tpu_custom_call.1} parent=39 // pred_fallthru
          _
      $region40: #{tpu_custom_call.1} parent=5 // pred_fallthru
        _
      %p286 = scmp.le.s32.totalorder 1, %s18
      %p287 = scmp.lt.s32.totalorder %s18, 3
      %p288 = pnand %p286, %p287
      %p289 = pneg %p288
      // Predicated region
      $region45: #{tpu_custom_call.1} parent=5 // pred_check
        _
      $region46: #{tpu_custom_call.1} parent=5 // pred_check_branch
        %291 = sbr.rel (%p288) target = $region48
      $region47: #{tpu_custom_call.1} parent=5 // pred_region
        %s292 = ssub.s32 %s18, 1
        %s293 = sand.u32 %s31, 1
        %s294 = scalar_lea.sflag [#allocation4], %s293
        %s295 = sand.u32 %s31, 1
        %s296 = smul.addr %s295, 256
        %s297 = scalar_lea.vmem [#allocation3], %s296
        // Predicated region
        $region49: #{tpu_custom_call.1} parent=47 // pred_check
          %p298 = pneg %p44
        $region50: #{tpu_custom_call.1} parent=47 // pred_check_branch
          %300 = sbr.rel (%p298) target = $region52
        $region51: #{tpu_custom_call.1} parent=47 // pred_region
          %302 = dma.done %s294, 4096
        $region52: #{tpu_custom_call.1} parent=47 // pred_fallthru
          _
        // Predicated region
        $region53: #{tpu_custom_call.1} parent=47 // pred_check
          %p303 = pneg %p65
        $region54: #{tpu_custom_call.1} parent=47 // pred_check_branch
          %305 = sbr.rel (%p303) target = $region56
        $region55: #{tpu_custom_call.1} parent=47 // pred_region
          %307 = dma.done [#allocation6], 2048
        $region56: #{tpu_custom_call.1} parent=47 // pred_fallthru
          _
        // Predicated region
        $region57: #{tpu_custom_call.1} parent=47 // pred_check
          %p308 = pneg %p107
        $region58: #{tpu_custom_call.1} parent=47 // pred_check_branch
          %310 = sbr.rel (%p308) target = $region60
        $region59: #{tpu_custom_call.1} parent=47 // pred_region
          %312 = dma.done [#allocation6], 1024
        $region60: #{tpu_custom_call.1} parent=47 // pred_fallthru
          _
        %s313 = sand.u32 %s31, 1
        %s314 = scalar_lea.sflag [#allocation4], %s313
        %s315 = sand.u32 %s31, 1
        %s316 = smul.addr %s315, 256
        %s317 = scalar_lea.vmem [#allocation3], %s316
        %p318 = pneg %p44
        %p319 = pneg %p41
        %p320 = pneg %p65
        %p321 = pneg %p62
        %p322 = pneg %p86
        %p323 = pneg %p83
        %p324 = pneg %p107
        %p325 = pneg %p104
        %p326 = pneg %p128
        %p327 = pneg %p125
        %p328 = pneg %p149
        %p329 = pneg %p146
        %p330 = pneg %p170
        %p331 = pneg %p167
        %p332 = pneg %p196
        %p333 = pneg %p193
        %s334 = sand.u32 %s183, 1
        %s335 = sand.u32 %s183, 1
        %s336 = smul.addr %s335, 128
        %s337 = scalar_lea.vmem [#allocation8], %s336
        %s338 = smul.u32 16, %s23
        %s339 = ssub.s32 25, %s338
        %p340 = scmp.lt.s32.totalorder %s339, 16
        %s341 = scalar_select %p340, %s339, 16
        %s342 = smul.u32 8, %s341
        %s343 = smul.u32 %s342, 2
        %s344 = smul.u32 16, %s23
        %s345 = ssub.s32 25, %s344
        %p346 = scmp.lt.s32.totalorder %s345, 16
        %s347 = scalar_select %p346, %s345, 16
        %s348 = smul.u32 8, %s347
        %v349 = vld [vmem:[%s297] sm:$0xff]
        %v350 = vld [vmem:[%s297 + $0x8] sm:$0xff]
        %v351 = vld [vmem:[%s297 + $0x10] sm:$0xff]
        %v352 = vld [vmem:[%s297 + $0x18] sm:$0xff]
        %v353 = vld [vmem:[%s297 + $0x20] sm:$0xff]
        %v354 = vld [vmem:[%s297 + $0x28] sm:$0xff]
        %v355 = vld [vmem:[%s297 + $0x30] sm:$0xff]
        %v356 = vld [vmem:[%s297 + $0x38] sm:$0xff]
        %v357 = vld [vmem:[%s297 + $0x40] sm:$0xff]
        %v358 = vld [vmem:[%s297 + $0x48] sm:$0xff]
        %v359 = vld [vmem:[%s297 + $0x50] sm:$0xff]
        %v360 = vld [vmem:[%s297 + $0x58] sm:$0xff]
        %v361 = vld [vmem:[%s297 + $0x60] sm:$0xff]
        %v362 = vld [vmem:[%s297 + $0x68] sm:$0xff]
        %v363 = vld [vmem:[%s297 + $0x70] sm:$0xff]
        %v364 = vld [vmem:[%s297 + $0x78] sm:$0xff]
        %v365 = vld [vmem:[%s297 + $0x80] sm:$0xff]
        %v366 = vld [vmem:[%s297 + $0x88] sm:$0xff]
        %v367 = vld [vmem:[%s297 + $0x90] sm:$0xff]
        %v368 = vld [vmem:[%s297 + $0x98] sm:$0xff]
        %v369 = vld [vmem:[%s297 + $0xa0] sm:$0xff]
        %v370 = vld [vmem:[%s297 + $0xa8] sm:$0xff]
        %v371 = vld [vmem:[%s297 + $0xb0] sm:$0xff]
        %v372 = vld [vmem:[%s297 + $0xb8] sm:$0xff]
        %v373 = vld [vmem:[%s297 + $0xc0] sm:$0xff]
        %v374 = vld [vmem:[%s297 + $0xc8] sm:$0xff]
        %v375 = vld [vmem:[%s297 + $0xd0] sm:$0xff]
        %v376 = vld [vmem:[%s297 + $0xd8] sm:$0xff]
        %v377 = vld [vmem:[%s297 + $0xe0] sm:$0xff]
        %v378 = vld [vmem:[%s297 + $0xe8] sm:$0xff]
        %v379 = vld [vmem:[%s297 + $0xf0] sm:$0xff]
        %v380 = vld [vmem:[%s297 + $0xf8] sm:$0xff]
        %v381 = vpack.c.bf16 %v351, %v349
        %v382 = vpack.c.bf16 %v352, %v350
        %v383 = vpack.c.bf16 %v355, %v353
        %v384 = vpack.c.bf16 %v356, %v354
        %v385 = vpack.c.bf16 %v359, %v357
        %v386 = vpack.c.bf16 %v360, %v358
        %v387 = vpack.c.bf16 %v363, %v361
        %v388 = vpack.c.bf16 %v364, %v362
        %v389 = vpack.c.bf16 %v367, %v365
        %v390 = vpack.c.bf16 %v368, %v366
        %v391 = vpack.c.bf16 %v371, %v369
        %v392 = vpack.c.bf16 %v372, %v370
        %v393 = vpack.c.bf16 %v375, %v373
        %v394 = vpack.c.bf16 %v376, %v374
        %v395 = vpack.c.bf16 %v379, %v377
        %v396 = vpack.c.bf16 %v380, %v378
        %v397 = vld [vmem:[#allocation5] sm:$0xf]
        %v398 = vld [vmem:[#allocation5 + $0x4] sm:$0xf]
        %v399 = vld [vmem:[#allocation5 + $0x8] sm:$0xf]
        %v400 = vld [vmem:[#allocation5 + $0xc] sm:$0xf]
        %v401 = vld [vmem:[#allocation5 + $0x10] sm:$0xf]
        %v402 = vld [vmem:[#allocation5 + $0x14] sm:$0xf]
        %v403 = vld [vmem:[#allocation5 + $0x18] sm:$0xf]
        %v404 = vld [vmem:[#allocation5 + $0x1c] sm:$0xf]
        %v405 = vld [vmem:[#allocation5 + $0x20] sm:$0xf]
        %v406 = vld [vmem:[#allocation5 + $0x24] sm:$0xf]
        %v407 = vld [vmem:[#allocation5 + $0x28] sm:$0xf]
        %v408 = vld [vmem:[#allocation5 + $0x2c] sm:$0xf]
        %v409 = vld [vmem:[#allocation5 + $0x30] sm:$0xf]
        %v410 = vld [vmem:[#allocation5 + $0x34] sm:$0xf]
        %v411 = vld [vmem:[#allocation5 + $0x38] sm:$0xf]
        %v412 = vld [vmem:[#allocation5 + $0x3c] sm:$0xf]
        %v413 = vld [vmem:[#allocation5 + $0x40] sm:$0xf]
        %v414 = vld [vmem:[#allocation5 + $0x44] sm:$0xf]
        %v415 = vld [vmem:[#allocation5 + $0x48] sm:$0xf]
        %v416 = vld [vmem:[#allocation5 + $0x4c] sm:$0xf]
        %v417 = vld [vmem:[#allocation5 + $0x50] sm:$0xf]
        %v418 = vld [vmem:[#allocation5 + $0x54] sm:$0xf]
        %v419 = vld [vmem:[#allocation5 + $0x58] sm:$0xf]
        %v420 = vld [vmem:[#allocation5 + $0x5c] sm:$0xf]
        %v421 = vld [vmem:[#allocation5 + $0x60] sm:$0xf]
        %v422 = vld [vmem:[#allocation5 + $0x64] sm:$0xf]
        %v423 = vld [vmem:[#allocation5 + $0x68] sm:$0xf]
        %v424 = vld [vmem:[#allocation5 + $0x6c] sm:$0xf]
        %v425 = vld [vmem:[#allocation5 + $0x70] sm:$0xf]
        %v426 = vld [vmem:[#allocation5 + $0x74] sm:$0xf]
        %v427 = vld [vmem:[#allocation5 + $0x78] sm:$0xf]
        %v428 = vld [vmem:[#allocation5 + $0x7c] sm:$0xf]
        %v429 = vld [vmem:[%s2] sm:$0x1]
        %v431 = vperm.slane %v429, 0
        %v465 = vunpack.c.l.b16 %v397
        %v466 = vunpack.c.l.b16 %v398
        %v467 = vunpack.c.l.b16 %v399
        %v468 = vunpack.c.l.b16 %v400
        %v469 = vunpack.c.l.b16 %v401
        %v470 = vunpack.c.l.b16 %v402
        %v471 = vunpack.c.l.b16 %v403
        %v472 = vunpack.c.l.b16 %v404
        %v473 = vunpack.c.l.b16 %v405
        %v474 = vunpack.c.l.b16 %v406
        %v475 = vunpack.c.l.b16 %v407
        %v476 = vunpack.c.l.b16 %v408
        %v477 = vunpack.c.l.b16 %v409
        %v478 = vunpack.c.l.b16 %v410
        %v479 = vunpack.c.l.b16 %v411
        %v480 = vunpack.c.l.b16 %v412
        %v481 = vunpack.c.l.b16 %v413
        %v482 = vunpack.c.l.b16 %v414
        %v483 = vunpack.c.l.b16 %v415
        %v484 = vunpack.c.l.b16 %v416
        %v485 = vunpack.c.l.b16 %v417
        %v486 = vunpack.c.l.b16 %v418
        %v487 = vunpack.c.l.b16 %v419
        %v488 = vunpack.c.l.b16 %v420
        %v489 = vunpack.c.l.b16 %v421
        %v490 = vunpack.c.l.b16 %v422
        %v491 = vunpack.c.l.b16 %v423
        %v492 = vunpack.c.l.b16 %v424
        %v493 = vunpack.c.l.b16 %v425
        %v494 = vunpack.c.l.b16 %v426
        %v495 = vunpack.c.l.b16 %v427
        %v496 = vunpack.c.l.b16 %v428
        %v497 = vpack.c.b16 %v466, %v465
        %v498 = vpack.c.b16 %v468, %v467
        %v499 = vpack.c.b16 %v470, %v469
        %v500 = vpack.c.b16 %v472, %v471
        %v501 = vpack.c.b16 %v474, %v473
        %v502 = vpack.c.b16 %v476, %v475
        %v503 = vpack.c.b16 %v478, %v477
        %v504 = vpack.c.b16 %v480, %v479
        %v505 = vpack.c.b16 %v482, %v481
        %v506 = vpack.c.b16 %v484, %v483
        %v507 = vpack.c.b16 %v486, %v485
        %v508 = vpack.c.b16 %v488, %v487
        %v509 = vpack.c.b16 %v490, %v489
        %v510 = vpack.c.b16 %v492, %v491
        %v511 = vpack.c.b16 %v494, %v493
        %v512 = vpack.c.b16 %v496, %v495
        %529 = vmatpush.bf16.msra.mxu0 %v504
        %530 = vmatpush.bf16.msra.mxu0 %v503
        %531 = vmatpush.bf16.msra.mxu0 %v502
        %532 = vmatpush.bf16.msra.mxu0 %v501
        %533 = vmatpush.bf16.msra.mxu0 %v500
        %534 = vmatpush.bf16.msra.mxu0 %v499
        %535 = vmatpush.bf16.msra.mxu0 %v498
        %536 = vmatpush.bf16.msra.mxu0 %v497
        %537 = vmatmul.bf16.gmra.mxu0 %v381
        %v538 = vpop.f32.mrf.mxu0
        %v539 = vadd.f32 %v431, %v538
        %v540 = vpop.f32.mrf.mxu0
        %v541 = vadd.f32 %v431, %v540
        %542 = vmatmul.bf16.gmra.mxu0 %v383
        %v543 = vpop.f32.mrf.mxu0
        %v544 = vadd.f32 %v431, %v543
        %v545 = vpop.f32.mrf.mxu0
        %v546 = vadd.f32 %v431, %v545
        %547 = vmatmul.bf16.gmra.mxu0 %v385
        %v548 = vpop.f32.mrf.mxu0
        %v549 = vadd.f32 %v431, %v548
        %v550 = vpop.f32.mrf.mxu0
        %v551 = vadd.f32 %v431, %v550
        %552 = vmatmul.bf16.gmra.mxu0 %v387
        %v553 = vpop.f32.mrf.mxu0
        %v554 = vadd.f32 %v431, %v553
        %v555 = vpop.f32.mrf.mxu0
        %v556 = vadd.f32 %v431, %v555
        %557 = vmatmul.bf16.gmra.mxu0 %v389
        %v558 = vpop.f32.mrf.mxu0
        %v559 = vadd.f32 %v431, %v558
        %v560 = vpop.f32.mrf.mxu0
        %v561 = vadd.f32 %v431, %v560
        %562 = vmatmul.bf16.gmra.mxu0 %v391
        %v563 = vpop.f32.mrf.mxu0
        %v564 = vadd.f32 %v431, %v563
        %v565 = vpop.f32.mrf.mxu0
        %v566 = vadd.f32 %v431, %v565
        %567 = vmatmul.bf16.gmra.mxu0 %v393
        %v568 = vpop.f32.mrf.mxu0
        %v569 = vadd.f32 %v431, %v568
        %v570 = vpop.f32.mrf.mxu0
        %v571 = vadd.f32 %v431, %v570
        %572 = vmatmul.bf16.gmra.mxu0 %v395
        %v573 = vpop.f32.mrf.mxu0
        %v574 = vadd.f32 %v431, %v573
        %v575 = vpop.f32.mrf.mxu0
        %v576 = vadd.f32 %v431, %v575
        %577 = vdwg.mxu0
        %578 = vmatpush.bf16.msra.mxu0 %v512
        %579 = vmatpush.bf16.msra.mxu0 %v511
        %580 = vmatpush.bf16.msra.mxu0 %v510
        %581 = vmatpush.bf16.msra.mxu0 %v509
        %582 = vmatpush.bf16.msra.mxu0 %v508
        %583 = vmatpush.bf16.msra.mxu0 %v507
        %584 = vmatpush.bf16.msra.mxu0 %v506
        %585 = vmatpush.bf16.msra.mxu0 %v505
        %586 = vmatmul.bf16.gmra.mxu0 %v382
        %v587 = vpop.f32.mrf.mxu0
        %v588 = vadd.f32 %v539, %v587
        %v589 = vpop.f32.mrf.mxu0
        %v590 = vadd.f32 %v541, %v589
        %591 = vmatmul.bf16.gmra.mxu0 %v384
        %v592 = vpop.f32.mrf.mxu0
        %v593 = vadd.f32 %v544, %v592
        %v594 = vpop.f32.mrf.mxu0
        %v595 = vadd.f32 %v546, %v594
        %596 = vmatmul.bf16.gmra.mxu0 %v386
        %v597 = vpop.f32.mrf.mxu0
        %v598 = vadd.f32 %v549, %v597
        %v599 = vpop.f32.mrf.mxu0
        %v600 = vadd.f32 %v551, %v599
        %601 = vmatmul.bf16.gmra.mxu0 %v388
        %v602 = vpop.f32.mrf.mxu0
        %v603 = vadd.f32 %v554, %v602
        %v604 = vpop.f32.mrf.mxu0
        %v605 = vadd.f32 %v556, %v604
        %606 = vmatmul.bf16.gmra.mxu0 %v390
        %v607 = vpop.f32.mrf.mxu0
        %v608 = vadd.f32 %v559, %v607
        %v609 = vpop.f32.mrf.mxu0
        %v610 = vadd.f32 %v561, %v609
        %611 = vmatmul.bf16.gmra.mxu0 %v392
        %v612 = vpop.f32.mrf.mxu0
        %v613 = vadd.f32 %v564, %v612
        %v614 = vpop.f32.mrf.mxu0
        %v615 = vadd.f32 %v566, %v614
        %616 = vmatmul.bf16.gmra.mxu0 %v394
        %v617 = vpop.f32.mrf.mxu0
        %v618 = vadd.f32 %v569, %v617
        %v619 = vpop.f32.mrf.mxu0
        %v620 = vadd.f32 %v571, %v619
        %621 = vmatmul.bf16.gmra.mxu0 %v396
        %v622 = vpop.f32.mrf.mxu0
        %v623 = vadd.f32 %v574, %v622
        %v624 = vpop.f32.mrf.mxu0
        %v625 = vadd.f32 %v576, %v624
        %626 = vdwg.mxu0
        %v627 = vmax.f32 %v588, 0.0
        %v628 = vmax.f32 %v590, 0.0
        %v629 = vmax.f32 %v593, 0.0
        %v630 = vmax.f32 %v595, 0.0
        %v631 = vmax.f32 %v598, 0.0
        %v632 = vmax.f32 %v600, 0.0
        %v633 = vmax.f32 %v603, 0.0
        %v634 = vmax.f32 %v605, 0.0
        %v635 = vmax.f32 %v608, 0.0
        %v636 = vmax.f32 %v610, 0.0
        %v637 = vmax.f32 %v613, 0.0
        %v638 = vmax.f32 %v615, 0.0
        %v639 = vmax.f32 %v618, 0.0
        %v640 = vmax.f32 %v620, 0.0
        %v641 = vmax.f32 %v623, 0.0
        %v642 = vmax.f32 %v625, 0.0
        %v643 = vpack.c.bf16 %v628, %v627
        %v644 = vpack.c.bf16 %v630, %v629
        %v645 = vpack.c.bf16 %v632, %v631
        %v646 = vpack.c.bf16 %v634, %v633
        %v647 = vpack.c.bf16 %v636, %v635
        %v648 = vpack.c.bf16 %v638, %v637
        %v649 = vpack.c.bf16 %v640, %v639
        %v650 = vpack.c.bf16 %v642, %v641
        %v651 = vld [vmem:[#allocation7] sm:$0xf]
        %v652 = vld [vmem:[#allocation7 + $0x4] sm:$0xf]
        %v653 = vld [vmem:[#allocation7 + $0x8] sm:$0xf]
        %v654 = vld [vmem:[#allocation7 + $0xc] sm:$0xf]
        %v655 = vld [vmem:[#allocation7 + $0x10] sm:$0xf]
        %v656 = vld [vmem:[#allocation7 + $0x14] sm:$0xf]
        %v657 = vld [vmem:[#allocation7 + $0x18] sm:$0xf]
        %v658 = vld [vmem:[#allocation7 + $0x1c] sm:$0xf]
        %v659 = vld [vmem:[#allocation7 + $0x20] sm:$0xf]
        %v660 = vld [vmem:[#allocation7 + $0x24] sm:$0xf]
        %v661 = vld [vmem:[#allocation7 + $0x28] sm:$0xf]
        %v662 = vld [vmem:[#allocation7 + $0x2c] sm:$0xf]
        %v663 = vld [vmem:[#allocation7 + $0x30] sm:$0xf]
        %v664 = vld [vmem:[#allocation7 + $0x34] sm:$0xf]
        %v665 = vld [vmem:[#allocation7 + $0x38] sm:$0xf]
        %v666 = vld [vmem:[#allocation7 + $0x3c] sm:$0xf]
        %v667 = vld [vmem:[%s4] sm:$0x1]
        %v669 = vperm.slane %v667, 0
        %v687 = vunpack.c.l.b16 %v651
        %v688 = vunpack.c.l.b16 %v652
        %v689 = vunpack.c.l.b16 %v653
        %v690 = vunpack.c.l.b16 %v654
        %v691 = vunpack.c.l.b16 %v655
        %v692 = vunpack.c.l.b16 %v656
        %v693 = vunpack.c.l.b16 %v657
        %v694 = vunpack.c.l.b16 %v658
        %v695 = vunpack.c.l.b16 %v659
        %v696 = vunpack.c.l.b16 %v660
        %v697 = vunpack.c.l.b16 %v661
        %v698 = vunpack.c.l.b16 %v662
        %v699 = vunpack.c.l.b16 %v663
        %v700 = vunpack.c.l.b16 %v664
        %v701 = vunpack.c.l.b16 %v665
        %v702 = vunpack.c.l.b16 %v666
        %v703 = vpack.c.b16 %v688, %v687
        %v704 = vpack.c.b16 %v690, %v689
        %v705 = vpack.c.b16 %v692, %v691
        %v706 = vpack.c.b16 %v694, %v693
        %v707 = vpack.c.b16 %v696, %v695
        %v708 = vpack.c.b16 %v698, %v697
        %v709 = vpack.c.b16 %v700, %v699
        %v710 = vpack.c.b16 %v702, %v701
        %719 = vmatpush.bf16.msra.mxu0 %v710
        %720 = vmatpush.bf16.msra.mxu0 %v709
        %721 = vmatpush.bf16.msra.mxu0 %v708
        %722 = vmatpush.bf16.msra.mxu0 %v707
        %723 = vmatpush.bf16.msra.mxu0 %v706
        %724 = vmatpush.bf16.msra.mxu0 %v705
        %725 = vmatpush.bf16.msra.mxu0 %v704
        %726 = vmatpush.bf16.msra.mxu0 %v703
        %727 = vmatmul.bf16.gmra.mxu0 %v643
        %v728 = vpop.f32.mrf.mxu0
        %v729 = vadd.f32 %v669, %v728
        %v730 = vpop.f32.mrf.mxu0
        %v731 = vadd.f32 %v669, %v730
        %732 = vmatmul.bf16.gmra.mxu0 %v644
        %v733 = vpop.f32.mrf.mxu0
        %v734 = vadd.f32 %v669, %v733
        %v735 = vpop.f32.mrf.mxu0
        %v736 = vadd.f32 %v669, %v735
        %737 = vmatmul.bf16.gmra.mxu0 %v645
        %v738 = vpop.f32.mrf.mxu0
        %v739 = vadd.f32 %v669, %v738
        %v740 = vpop.f32.mrf.mxu0
        %v741 = vadd.f32 %v669, %v740
        %742 = vmatmul.bf16.gmra.mxu0 %v646
        %v743 = vpop.f32.mrf.mxu0
        %v744 = vadd.f32 %v669, %v743
        %v745 = vpop.f32.mrf.mxu0
        %v746 = vadd.f32 %v669, %v745
        %747 = vmatmul.bf16.gmra.mxu0 %v647
        %v748 = vpop.f32.mrf.mxu0
        %v749 = vadd.f32 %v669, %v748
        %v750 = vpop.f32.mrf.mxu0
        %v751 = vadd.f32 %v669, %v750
        %752 = vmatmul.bf16.gmra.mxu0 %v648
        %v753 = vpop.f32.mrf.mxu0
        %v754 = vadd.f32 %v669, %v753
        %v755 = vpop.f32.mrf.mxu0
        %v756 = vadd.f32 %v669, %v755
        %757 = vmatmul.bf16.gmra.mxu0 %v649
        %v758 = vpop.f32.mrf.mxu0
        %v759 = vadd.f32 %v669, %v758
        %v760 = vpop.f32.mrf.mxu0
        %v761 = vadd.f32 %v669, %v760
        %762 = vmatmul.bf16.gmra.mxu0 %v650
        %v763 = vpop.f32.mrf.mxu0
        %v764 = vadd.f32 %v669, %v763
        %v765 = vpop.f32.mrf.mxu0
        %v766 = vadd.f32 %v669, %v765
        %767 = vdwg.mxu0
        %v768 = vmax.f32 %v729, 0.0
        %v769 = vmax.f32 %v731, 0.0
        %v770 = vmax.f32 %v734, 0.0
        %v771 = vmax.f32 %v736, 0.0
        %v772 = vmax.f32 %v739, 0.0
        %v773 = vmax.f32 %v741, 0.0
        %v774 = vmax.f32 %v744, 0.0
        %v775 = vmax.f32 %v746, 0.0
        %v776 = vmax.f32 %v749, 0.0
        %v777 = vmax.f32 %v751, 0.0
        %v778 = vmax.f32 %v754, 0.0
        %v779 = vmax.f32 %v756, 0.0
        %v780 = vmax.f32 %v759, 0.0
        %v781 = vmax.f32 %v761, 0.0
        %v782 = vmax.f32 %v764, 0.0
        %v783 = vmax.f32 %v766, 0.0
        %v784 = vld [vmem:[%s5] sm:$0x1]
        %v785 = vunpack.c.l.bf16 %v784
        %v786 = vperm.slane %v785, 0
        %v787 = vmul.f32 %v768, %v786
        %v788 = vmul.f32 %v769, %v786
        %v789 = vmul.f32 %v770, %v786
        %v790 = vmul.f32 %v771, %v786
        %v791 = vmul.f32 %v772, %v786
        %v792 = vmul.f32 %v773, %v786
        %v793 = vmul.f32 %v774, %v786
        %v794 = vmul.f32 %v775, %v786
        %v795 = vmul.f32 %v776, %v786
        %v796 = vmul.f32 %v777, %v786
        %v797 = vmul.f32 %v778, %v786
        %v798 = vmul.f32 %v779, %v786
        %v799 = vmul.f32 %v780, %v786
        %v800 = vmul.f32 %v781, %v786
        %v801 = vmul.f32 %v782, %v786
        %v802 = vmul.f32 %v783, %v786
        %803 = vadd.xlane.f32.xlu0 %v787
        %v804 = vpop.xlane.xlu0 %803
        %805 = vadd.xlane.f32.xlu0 %v788
        %v806 = vpop.xlane.xlu0 %805
        %807 = vadd.xlane.f32.xlu0 %v789
        %v808 = vpop.xlane.xlu0 %807
        %809 = vadd.xlane.f32.xlu0 %v790
        %v810 = vpop.xlane.xlu0 %809
        %811 = vadd.xlane.f32.xlu0 %v791
        %v812 = vpop.xlane.xlu0 %811
        %813 = vadd.xlane.f32.xlu0 %v792
        %v814 = vpop.xlane.xlu0 %813
        %815 = vadd.xlane.f32.xlu0 %v793
        %v816 = vpop.xlane.xlu0 %815
        %817 = vadd.xlane.f32.xlu0 %v794
        %v818 = vpop.xlane.xlu0 %817
        %819 = vadd.xlane.f32.xlu0 %v795
        %v820 = vpop.xlane.xlu0 %819
        %821 = vadd.xlane.f32.xlu0 %v796
        %v822 = vpop.xlane.xlu0 %821
        %823 = vadd.xlane.f32.xlu0 %v797
        %v824 = vpop.xlane.xlu0 %823
        %825 = vadd.xlane.f32.xlu0 %v798
        %v826 = vpop.xlane.xlu0 %825
        %827 = vadd.xlane.f32.xlu0 %v799
        %v828 = vpop.xlane.xlu0 %827
        %829 = vadd.xlane.f32.xlu0 %v800
        %v830 = vpop.xlane.xlu0 %829
        %831 = vadd.xlane.f32.xlu0 %v801
        %v832 = vpop.xlane.xlu0 %831
        %833 = vadd.xlane.f32.xlu0 %v802
        %v834 = vpop.xlane.xlu0 %833
        %s835 = sld [smem:[#allocation2]]
        %v836 = vstv %s835
        %v837 = vadd.f32 %v804, %v836
        %v838 = vadd.f32 %v806, %v836
        %v839 = vadd.f32 %v808, %v836
        %v840 = vadd.f32 %v810, %v836
        %v841 = vadd.f32 %v812, %v836
        %v842 = vadd.f32 %v814, %v836
        %v843 = vadd.f32 %v816, %v836
        %v844 = vadd.f32 %v818, %v836
        %v845 = vadd.f32 %v820, %v836
        %v846 = vadd.f32 %v822, %v836
        %v847 = vadd.f32 %v824, %v836
        %v848 = vadd.f32 %v826, %v836
        %v849 = vadd.f32 %v828, %v836
        %v850 = vadd.f32 %v830, %v836
        %v851 = vadd.f32 %v832, %v836
        %v852 = vadd.f32 %v834, %v836
        %v853 = vsub.f32 0.0, %v837
        %v854 = vsub.f32 0.0, %v838
        %v855 = vsub.f32 0.0, %v839
        %v856 = vsub.f32 0.0, %v840
        %v857 = vsub.f32 0.0, %v841
        %v858 = vsub.f32 0.0, %v842
        %v859 = vsub.f32 0.0, %v843
        %v860 = vsub.f32 0.0, %v844
        %v861 = vsub.f32 0.0, %v845
        %v862 = vsub.f32 0.0, %v846
        %v863 = vsub.f32 0.0, %v847
        %v864 = vsub.f32 0.0, %v848
        %v865 = vsub.f32 0.0, %v849
        %v866 = vsub.f32 0.0, %v850
        %v867 = vsub.f32 0.0, %v851
        %v868 = vsub.f32 0.0, %v852
        %v869 = vmul.f32 %v853, 1.442695
        %v870 = vpow.pop %v869
        %v871 = vmul.f32 %v854, 1.442695
        %v872 = vpow.pop %v871
        %v873 = vmul.f32 %v855, 1.442695
        %v874 = vpow.pop %v873
        %v875 = vmul.f32 %v856, 1.442695
        %v876 = vpow.pop %v875
        %v877 = vmul.f32 %v857, 1.442695
        %v878 = vpow.pop %v877
        %v879 = vmul.f32 %v858, 1.442695
        %v880 = vpow.pop %v879
        %v881 = vmul.f32 %v859, 1.442695
        %v882 = vpow.pop %v881
        %v883 = vmul.f32 %v860, 1.442695
        %v884 = vpow.pop %v883
        %v885 = vmul.f32 %v861, 1.442695
        %v886 = vpow.pop %v885
        %v887 = vmul.f32 %v862, 1.442695
        %v888 = vpow.pop %v887
        %v889 = vmul.f32 %v863, 1.442695
        %v890 = vpow.pop %v889
        %v891 = vmul.f32 %v864, 1.442695
        %v892 = vpow.pop %v891
        %v893 = vmul.f32 %v865, 1.442695
        %v894 = vpow.pop %v893
        %v895 = vmul.f32 %v866, 1.442695
        %v896 = vpow.pop %v895
        %v897 = vmul.f32 %v867, 1.442695
        %v898 = vpow.pop %v897
        %v899 = vmul.f32 %v868, 1.442695
        %v900 = vpow.pop %v899
        %v901 = vadd.f32 %v870, 1.0
        %v902 = vadd.f32 %v872, 1.0
        %v903 = vadd.f32 %v874, 1.0
        %v904 = vadd.f32 %v876, 1.0
        %v905 = vadd.f32 %v878, 1.0
        %v906 = vadd.f32 %v880, 1.0
        %v907 = vadd.f32 %v882, 1.0
        %v908 = vadd.f32 %v884, 1.0
        %v909 = vadd.f32 %v886, 1.0
        %v910 = vadd.f32 %v888, 1.0
        %v911 = vadd.f32 %v890, 1.0
        %v912 = vadd.f32 %v892, 1.0
        %v913 = vadd.f32 %v894, 1.0
        %v914 = vadd.f32 %v896, 1.0
        %v915 = vadd.f32 %v898, 1.0
        %v916 = vadd.f32 %v900, 1.0
        %v917 = vrcp.pop %v901
        %v918 = vmul.f32 %v901, %v917
        %v919 = vsub.f32 1.0, %v918
        %v920 = vmul.f32 %v917, %v919
        %v921 = vadd.f32 %v917, %v920
        %vm922 = vweird.f32 %v901
        %vm923 = vweird.f32 %v917
        %vm924 = vmor %vm922, %vm923
        %v925 = vsel %vm924, %v917, %v921
        %v926 = vand.u32 2147483647, %v901
        %vm927 = vcmp.eq.f32.partialorder %v926, 8.507059e+37
        %v928 = vand.u32 %v901, 2147483648
        %v929 = vor.u32 1.1754944e-38, %v928
        %v930 = vsel %vm927, %v929, %v925
        %v931 = vmul.f32 1.0, %v930
        %v932 = vrcp.pop %v902
        %v933 = vmul.f32 %v902, %v932
        %v934 = vsub.f32 1.0, %v933
        %v935 = vmul.f32 %v932, %v934
        %v936 = vadd.f32 %v932, %v935
        %vm937 = vweird.f32 %v902
        %vm938 = vweird.f32 %v932
        %vm939 = vmor %vm937, %vm938
        %v940 = vsel %vm939, %v932, %v936
        %v941 = vand.u32 2147483647, %v902
        %vm942 = vcmp.eq.f32.partialorder %v941, 8.507059e+37
        %v943 = vand.u32 %v902, 2147483648
        %v944 = vor.u32 1.1754944e-38, %v943
        %v945 = vsel %vm942, %v944, %v940
        %v946 = vmul.f32 1.0, %v945
        %v947 = vrcp.pop %v903
        %v948 = vmul.f32 %v903, %v947
        %v949 = vsub.f32 1.0, %v948
        %v950 = vmul.f32 %v947, %v949
        %v951 = vadd.f32 %v947, %v950
        %vm952 = vweird.f32 %v903
        %vm953 = vweird.f32 %v947
        %vm954 = vmor %vm952, %vm953
        %v955 = vsel %vm954, %v947, %v951
        %v956 = vand.u32 2147483647, %v903
        %vm957 = vcmp.eq.f32.partialorder %v956, 8.507059e+37
        %v958 = vand.u32 %v903, 2147483648
        %v959 = vor.u32 1.1754944e-38, %v958
        %v960 = vsel %vm957, %v959, %v955
        %v961 = vmul.f32 1.0, %v960
        %v962 = vrcp.pop %v904
        %v963 = vmul.f32 %v904, %v962
        %v964 = vsub.f32 1.0, %v963
        %v965 = vmul.f32 %v962, %v964
        %v966 = vadd.f32 %v962, %v965
        %vm967 = vweird.f32 %v904
        %vm968 = vweird.f32 %v962
        %vm969 = vmor %vm967, %vm968
        %v970 = vsel %vm969, %v962, %v966
        %v971 = vand.u32 2147483647, %v904
        %vm972 = vcmp.eq.f32.partialorder %v971, 8.507059e+37
        %v973 = vand.u32 %v904, 2147483648
        %v974 = vor.u32 1.1754944e-38, %v973
        %v975 = vsel %vm972, %v974, %v970
        %v976 = vmul.f32 1.0, %v975
        %v977 = vrcp.pop %v905
        %v978 = vmul.f32 %v905, %v977
        %v979 = vsub.f32 1.0, %v978
        %v980 = vmul.f32 %v977, %v979
        %v981 = vadd.f32 %v977, %v980
        %vm982 = vweird.f32 %v905
        %vm983 = vweird.f32 %v977
        %vm984 = vmor %vm982, %vm983
        %v985 = vsel %vm984, %v977, %v981
        %v986 = vand.u32 2147483647, %v905
        %vm987 = vcmp.eq.f32.partialorder %v986, 8.507059e+37
        %v988 = vand.u32 %v905, 2147483648
        %v989 = vor.u32 1.1754944e-38, %v988
        %v990 = vsel %vm987, %v989, %v985
        %v991 = vmul.f32 1.0, %v990
        %v992 = vrcp.pop %v906
        %v993 = vmul.f32 %v906, %v992
        %v994 = vsub.f32 1.0, %v993
        %v995 = vmul.f32 %v992, %v994
        %v996 = vadd.f32 %v992, %v995
        %vm997 = vweird.f32 %v906
        %vm998 = vweird.f32 %v992
        %vm999 = vmor %vm997, %vm998
        %v1000 = vsel %vm999, %v992, %v996
        %v1001 = vand.u32 2147483647, %v906
        %vm1002 = vcmp.eq.f32.partialorder %v1001, 8.507059e+37
        %v1003 = vand.u32 %v906, 2147483648
        %v1004 = vor.u32 1.1754944e-38, %v1003
        %v1005 = vsel %vm1002, %v1004, %v1000
        %v1006 = vmul.f32 1.0, %v1005
        %v1007 = vrcp.pop %v907
        %v1008 = vmul.f32 %v907, %v1007
        %v1009 = vsub.f32 1.0, %v1008
        %v1010 = vmul.f32 %v1007, %v1009
        %v1011 = vadd.f32 %v1007, %v1010
        %vm1012 = vweird.f32 %v907
        %vm1013 = vweird.f32 %v1007
        %vm1014 = vmor %vm1012, %vm1013
        %v1015 = vsel %vm1014, %v1007, %v1011
        %v1016 = vand.u32 2147483647, %v907
        %vm1017 = vcmp.eq.f32.partialorder %v1016, 8.507059e+37
        %v1018 = vand.u32 %v907, 2147483648
        %v1019 = vor.u32 1.1754944e-38, %v1018
        %v1020 = vsel %vm1017, %v1019, %v1015
        %v1021 = vmul.f32 1.0, %v1020
        %v1022 = vrcp.pop %v908
        %v1023 = vmul.f32 %v908, %v1022
        %v1024 = vsub.f32 1.0, %v1023
        %v1025 = vmul.f32 %v1022, %v1024
        %v1026 = vadd.f32 %v1022, %v1025
        %vm1027 = vweird.f32 %v908
        %vm1028 = vweird.f32 %v1022
        %vm1029 = vmor %vm1027, %vm1028
        %v1030 = vsel %vm1029, %v1022, %v1026
        %v1031 = vand.u32 2147483647, %v908
        %vm1032 = vcmp.eq.f32.partialorder %v1031, 8.507059e+37
        %v1033 = vand.u32 %v908, 2147483648
        %v1034 = vor.u32 1.1754944e-38, %v1033
        %v1035 = vsel %vm1032, %v1034, %v1030
        %v1036 = vmul.f32 1.0, %v1035
        %v1037 = vrcp.pop %v909
        %v1038 = vmul.f32 %v909, %v1037
        %v1039 = vsub.f32 1.0, %v1038
        %v1040 = vmul.f32 %v1037, %v1039
        %v1041 = vadd.f32 %v1037, %v1040
        %vm1042 = vweird.f32 %v909
        %vm1043 = vweird.f32 %v1037
        %vm1044 = vmor %vm1042, %vm1043
        %v1045 = vsel %vm1044, %v1037, %v1041
        %v1046 = vand.u32 2147483647, %v909
        %vm1047 = vcmp.eq.f32.partialorder %v1046, 8.507059e+37
        %v1048 = vand.u32 %v909, 2147483648
        %v1049 = vor.u32 1.1754944e-38, %v1048
        %v1050 = vsel %vm1047, %v1049, %v1045
        %v1051 = vmul.f32 1.0, %v1050
        %v1052 = vrcp.pop %v910
        %v1053 = vmul.f32 %v910, %v1052
        %v1054 = vsub.f32 1.0, %v1053
        %v1055 = vmul.f32 %v1052, %v1054
        %v1056 = vadd.f32 %v1052, %v1055
        %vm1057 = vweird.f32 %v910
        %vm1058 = vweird.f32 %v1052
        %vm1059 = vmor %vm1057, %vm1058
        %v1060 = vsel %vm1059, %v1052, %v1056
        %v1061 = vand.u32 2147483647, %v910
        %vm1062 = vcmp.eq.f32.partialorder %v1061, 8.507059e+37
        %v1063 = vand.u32 %v910, 2147483648
        %v1064 = vor.u32 1.1754944e-38, %v1063
        %v1065 = vsel %vm1062, %v1064, %v1060
        %v1066 = vmul.f32 1.0, %v1065
        %v1067 = vrcp.pop %v911
        %v1068 = vmul.f32 %v911, %v1067
        %v1069 = vsub.f32 1.0, %v1068
        %v1070 = vmul.f32 %v1067, %v1069
        %v1071 = vadd.f32 %v1067, %v1070
        %vm1072 = vweird.f32 %v911
        %vm1073 = vweird.f32 %v1067
        %vm1074 = vmor %vm1072, %vm1073
        %v1075 = vsel %vm1074, %v1067, %v1071
        %v1076 = vand.u32 2147483647, %v911
        %vm1077 = vcmp.eq.f32.partialorder %v1076, 8.507059e+37
        %v1078 = vand.u32 %v911, 2147483648
        %v1079 = vor.u32 1.1754944e-38, %v1078
        %v1080 = vsel %vm1077, %v1079, %v1075
        %v1081 = vmul.f32 1.0, %v1080
        %v1082 = vrcp.pop %v912
        %v1083 = vmul.f32 %v912, %v1082
        %v1084 = vsub.f32 1.0, %v1083
        %v1085 = vmul.f32 %v1082, %v1084
        %v1086 = vadd.f32 %v1082, %v1085
        %vm1087 = vweird.f32 %v912
        %vm1088 = vweird.f32 %v1082
        %vm1089 = vmor %vm1087, %vm1088
        %v1090 = vsel %vm1089, %v1082, %v1086
        %v1091 = vand.u32 2147483647, %v912
        %vm1092 = vcmp.eq.f32.partialorder %v1091, 8.507059e+37
        %v1093 = vand.u32 %v912, 2147483648
        %v1094 = vor.u32 1.1754944e-38, %v1093
        %v1095 = vsel %vm1092, %v1094, %v1090
        %v1096 = vmul.f32 1.0, %v1095
        %v1097 = vrcp.pop %v913
        %v1098 = vmul.f32 %v913, %v1097
        %v1099 = vsub.f32 1.0, %v1098
        %v1100 = vmul.f32 %v1097, %v1099
        %v1101 = vadd.f32 %v1097, %v1100
        %vm1102 = vweird.f32 %v913
        %vm1103 = vweird.f32 %v1097
        %vm1104 = vmor %vm1102, %vm1103
        %v1105 = vsel %vm1104, %v1097, %v1101
        %v1106 = vand.u32 2147483647, %v913
        %vm1107 = vcmp.eq.f32.partialorder %v1106, 8.507059e+37
        %v1108 = vand.u32 %v913, 2147483648
        %v1109 = vor.u32 1.1754944e-38, %v1108
        %v1110 = vsel %vm1107, %v1109, %v1105
        %v1111 = vmul.f32 1.0, %v1110
        %v1112 = vrcp.pop %v914
        %v1113 = vmul.f32 %v914, %v1112
        %v1114 = vsub.f32 1.0, %v1113
        %v1115 = vmul.f32 %v1112, %v1114
        %v1116 = vadd.f32 %v1112, %v1115
        %vm1117 = vweird.f32 %v914
        %vm1118 = vweird.f32 %v1112
        %vm1119 = vmor %vm1117, %vm1118
        %v1120 = vsel %vm1119, %v1112, %v1116
        %v1121 = vand.u32 2147483647, %v914
        %vm1122 = vcmp.eq.f32.partialorder %v1121, 8.507059e+37
        %v1123 = vand.u32 %v914, 2147483648
        %v1124 = vor.u32 1.1754944e-38, %v1123
        %v1125 = vsel %vm1122, %v1124, %v1120
        %v1126 = vmul.f32 1.0, %v1125
        %v1127 = vrcp.pop %v915
        %v1128 = vmul.f32 %v915, %v1127
        %v1129 = vsub.f32 1.0, %v1128
        %v1130 = vmul.f32 %v1127, %v1129
        %v1131 = vadd.f32 %v1127, %v1130
        %vm1132 = vweird.f32 %v915
        %vm1133 = vweird.f32 %v1127
        %vm1134 = vmor %vm1132, %vm1133
        %v1135 = vsel %vm1134, %v1127, %v1131
        %v1136 = vand.u32 2147483647, %v915
        %vm1137 = vcmp.eq.f32.partialorder %v1136, 8.507059e+37
        %v1138 = vand.u32 %v915, 2147483648
        %v1139 = vor.u32 1.1754944e-38, %v1138
        %v1140 = vsel %vm1137, %v1139, %v1135
        %v1141 = vmul.f32 1.0, %v1140
        %v1142 = vrcp.pop %v916
        %v1143 = vmul.f32 %v916, %v1142
        %v1144 = vsub.f32 1.0, %v1143
        %v1145 = vmul.f32 %v1142, %v1144
        %v1146 = vadd.f32 %v1142, %v1145
        %vm1147 = vweird.f32 %v916
        %vm1148 = vweird.f32 %v1142
        %vm1149 = vmor %vm1147, %vm1148
        %v1150 = vsel %vm1149, %v1142, %v1146
        %v1151 = vand.u32 2147483647, %v916
        %vm1152 = vcmp.eq.f32.partialorder %v1151, 8.507059e+37
        %v1153 = vand.u32 %v916, 2147483648
        %v1154 = vor.u32 1.1754944e-38, %v1153
        %v1155 = vsel %vm1152, %v1154, %v1150
        %v1156 = vmul.f32 1.0, %v1155
        %vm1157 = vcmask 7168
        %1158 = vst.msk [vmem:[%s337] sm:$0xff] %vm1157, %v931
        %1159 = vst.msk [vmem:[%s337 + $0x8] sm:$0xff] %vm1157, %v946
        %1160 = vst.msk [vmem:[%s337 + $0x10] sm:$0xff] %vm1157, %v961
        %1161 = vst.msk [vmem:[%s337 + $0x18] sm:$0xff] %vm1157, %v976
        %1162 = vst.msk [vmem:[%s337 + $0x20] sm:$0xff] %vm1157, %v991
        %1163 = vst.msk [vmem:[%s337 + $0x28] sm:$0xff] %vm1157, %v1006
        %1164 = vst.msk [vmem:[%s337 + $0x30] sm:$0xff] %vm1157, %v1021
        %1165 = vst.msk [vmem:[%s337 + $0x38] sm:$0xff] %vm1157, %v1036
        %1166 = vst.msk [vmem:[%s337 + $0x40] sm:$0xff] %vm1157, %v1051
        %1167 = vst.msk [vmem:[%s337 + $0x48] sm:$0xff] %vm1157, %v1066
        %1168 = vst.msk [vmem:[%s337 + $0x50] sm:$0xff] %vm1157, %v1081
        %1169 = vst.msk [vmem:[%s337 + $0x58] sm:$0xff] %vm1157, %v1096
        %1170 = vst.msk [vmem:[%s337 + $0x60] sm:$0xff] %vm1157, %v1111
        %1171 = vst.msk [vmem:[%s337 + $0x68] sm:$0xff] %vm1157, %v1126
        %1172 = vst.msk [vmem:[%s337 + $0x70] sm:$0xff] %vm1157, %v1141
        %1173 = vst.msk [vmem:[%s337 + $0x78] sm:$0xff] %vm1157, %v1156
        %s1174 = sand.u32 %s183, 1
        %s1175 = sand.u32 %s183, 1
        %s1176 = smul.addr %s1175, 128
        %s1177 = scalar_lea.vmem [#allocation8], %s1176
        // Predicated region
        $region61: #{tpu_custom_call.1} parent=47 // pred_check
          %p1178 = pneg %p193
        $region62: #{tpu_custom_call.1} parent=47 // pred_check_branch
          %1180 = sbr.rel (%p1178) target = $region64
        $region63: #{tpu_custom_call.1} parent=47 // pred_region
          %s1181 = smul.u32 16, %s23
          %s1182 = ssub.s32 25, %s1181
          %p1183 = scmp.lt.s32.totalorder %s1182, 16
          %s1184 = scalar_select %p1183, %s1182, 16
          %s1185 = smul.u32 8, %s1184
          %p1186 = scmp.ne.s32.totalorder 0, %s1185
          %s1187 = smul.addr %s1181, 8
          %s1188 = scalar_lea.vmem %s7, %s1187
          // Predicated region
          $region65: #{tpu_custom_call.1} parent=63 // pred_check
            %p1189 = pneg %p1186
          $region66: #{tpu_custom_call.1} parent=63 // pred_check_branch
            %1191 = sbr.rel (%p1189) target = $region68
          $region67: #{tpu_custom_call.1} parent=63 // pred_region
            // Predicated region
            $region69: #{tpu_custom_call.1} parent=67 // pred_check
              _
            $region70: #{tpu_custom_call.1} parent=67 // pred_check_branch
              %1193 = sbr.rel (0) target = $region72
            $region71: #{tpu_custom_call.1} parent=67 // pred_region
              // Predicated region
              $region91: #{tpu_custom_call.1} parent=71 // pred_check
                _
              $region92: #{tpu_custom_call.1} parent=71 // pred_check_branch
                %1273 = sbr.rel (0) target = $region94
              $region93: #{tpu_custom_call.1} parent=71 // pred_region
                %s1274 = sshrl.u32 %s1184, 4
                // While loop
                $region95: #{tpu_custom_call.1} parent=93 // loop_pre_header
                  _
                $region96: #{tpu_custom_call.1} parent=93 // loop_header
                  %s1276 = sphi 0, %s1278
                  %p1277 = scmp.ge.s32.totalorder %s1276, %s1274
                  %s1281 = sphi 0, %s1318
                  %s1282 = sphi %s1177, %s1321
                  %s1283 = sphi %s1188, %s1322
                $region97: #{tpu_custom_call.1} parent=93 // loop_header_branch
                  %1280 = sbr.rel (%p1277) target = $region101
                $region98: #{tpu_custom_call.1} parent=93 // loop_body
                  %v1284 = vld [vmem:[%s1282] sm:$0xff]
                  %1285 = vst [vmem:[%s1283] sm:$0xff] %v1284
                  %v1286 = vld [vmem:[%s1282 + $0x8] sm:$0xff]
                  %1287 = vst [vmem:[%s1283 + $0x8] sm:$0xff] %v1286
                  %v1288 = vld [vmem:[%s1282 + $0x10] sm:$0xff]
                  %1289 = vst [vmem:[%s1283 + $0x10] sm:$0xff] %v1288
                  %v1290 = vld [vmem:[%s1282 + $0x18] sm:$0xff]
                  %1291 = vst [vmem:[%s1283 + $0x18] sm:$0xff] %v1290
                  %v1292 = vld [vmem:[%s1282 + $0x20] sm:$0xff]
                  %1293 = vst [vmem:[%s1283 + $0x20] sm:$0xff] %v1292
                  %v1294 = vld [vmem:[%s1282 + $0x28] sm:$0xff]
                  %1295 = vst [vmem:[%s1283 + $0x28] sm:$0xff] %v1294
                  %v1296 = vld [vmem:[%s1282 + $0x30] sm:$0xff]
                  %1297 = vst [vmem:[%s1283 + $0x30] sm:$0xff] %v1296
                  %v1298 = vld [vmem:[%s1282 + $0x38] sm:$0xff]
                  %1299 = vst [vmem:[%s1283 + $0x38] sm:$0xff] %v1298
                  %v1300 = vld [vmem:[%s1282 + $0x40] sm:$0xff]
                  %1301 = vst [vmem:[%s1283 + $0x40] sm:$0xff] %v1300
                  %v1302 = vld [vmem:[%s1282 + $0x48] sm:$0xff]
                  %1303 = vst [vmem:[%s1283 + $0x48] sm:$0xff] %v1302
                  %v1304 = vld [vmem:[%s1282 + $0x50] sm:$0xff]
                  %1305 = vst [vmem:[%s1283 + $0x50] sm:$0xff] %v1304
                  %v1306 = vld [vmem:[%s1282 + $0x58] sm:$0xff]
                  %1307 = vst [vmem:[%s1283 + $0x58] sm:$0xff] %v1306
                  %v1308 = vld [vmem:[%s1282 + $0x60] sm:$0xff]
                  %1309 = vst [vmem:[%s1283 + $0x60] sm:$0xff] %v1308
                  %v1310 = vld [vmem:[%s1282 + $0x68] sm:$0xff]
                  %1311 = vst [vmem:[%s1283 + $0x68] sm:$0xff] %v1310
                  %v1312 = vld [vmem:[%s1282 + $0x70] sm:$0xff]
                  %1313 = vst [vmem:[%s1283 + $0x70] sm:$0xff] %v1312
                  %v1314 = vld [vmem:[%s1282 + $0x78] sm:$0xff]
                  %1315 = vst [vmem:[%s1283 + $0x78] sm:$0xff] %v1314
                  %s1316 = sadd.s32 1, %s1281
                  %p1317 = scmp.ge.s32.totalorder %s1316, %s1274
                  %s1318 = scalar_select %p1317, 0, %s1316
                  %s1319 = smul.u32 %s1318, 128
                  %s1320 = smul.u32 %s1318, 128
                  %s1321 = scalar_lea.vmem %s1177, %s1319 [#allocation8]
                  %s1322 = scalar_lea.vmem %s1188, %s1320
                $region99: #{tpu_custom_call.1} parent=93 // loop_footer
                  %s1278 = sadd.s32 %s1276, 1
                $region100: #{tpu_custom_call.1} parent=93 // loop_footer_branch
                  %1275 = sbr.rel target = $region96
                $region101: #{tpu_custom_call.1} parent=93 // loop_exit
                  _
                %s1323 = sshrl.u32 %s1184, 4
                %s1324 = sand.u32 %s1184, 15
                %s1325 = smul.u32 %s1323, 16
                %s1326 = smul.u32 8, %s1325
                %s1327 = scalar_lea.vmem %s1177, %s1326 [#allocation8]
                %s1328 = smul.u32 8, %s1325
                %s1329 = scalar_lea.vmem %s1188, %s1328
                // While loop
                $region102: #{tpu_custom_call.1} parent=93 // loop_pre_header
                  _
                $region103: #{tpu_custom_call.1} parent=93 // loop_header
                  %s1331 = sphi 0, %s1333
                  %p1332 = scmp.ge.s32.totalorder %s1331, %s1324
                  %s1336 = sphi 0, %s1343
                  %s1337 = sphi %s1327, %s1346
                  %s1338 = sphi %s1329, %s1347
                $region104: #{tpu_custom_call.1} parent=93 // loop_header_branch
                  %1335 = sbr.rel (%p1332) target = $region108
                $region105: #{tpu_custom_call.1} parent=93 // loop_body
                  %v1339 = vld [vmem:[%s1337] sm:$0xff]
                  %1340 = vst [vmem:[%s1338] sm:$0xff] %v1339
                  %s1341 = sadd.s32 1, %s1336
                  %p1342 = scmp.ge.s32.totalorder %s1341, %s1324
                  %s1343 = scalar_select %p1342, 0, %s1341
                  %s1344 = smul.u32 %s1343, 8
                  %s1345 = smul.u32 %s1343, 8
                  %s1346 = scalar_lea.vmem %s1327, %s1344 [#allocation8]
                  %s1347 = scalar_lea.vmem %s1329, %s1345
                $region106: #{tpu_custom_call.1} parent=93 // loop_footer
                  %s1333 = sadd.s32 %s1331, 1
                $region107: #{tpu_custom_call.1} parent=93 // loop_footer_branch
                  %1330 = sbr.rel target = $region103
                $region108: #{tpu_custom_call.1} parent=93 // loop_exit
                  _
              $region94: #{tpu_custom_call.1} parent=71 // pred_fallthru
                _
              // Predicated region
              $region109: #{tpu_custom_call.1} parent=71 // pred_check
                _
              $region110: #{tpu_custom_call.1} parent=71 // pred_check_branch
                %1349 = sbr.rel target = $region112
              $region111: #{tpu_custom_call.1} parent=71 // pred_region
                _
              $region112: #{tpu_custom_call.1} parent=71 // pred_fallthru
                _
            $region72: #{tpu_custom_call.1} parent=67 // pred_fallthru
              _
            // Predicated region
            $region73: #{tpu_custom_call.1} parent=67 // pred_check
              _
            $region74: #{tpu_custom_call.1} parent=67 // pred_check_branch
              %1195 = sbr.rel target = $region76
            $region75: #{tpu_custom_call.1} parent=67 // pred_region
              %s1197 = ssub.s32 256, 1
              %s1198 = sshrl.u32 %s1184, 4
              // While loop
              $region77: #{tpu_custom_call.1} parent=75 // loop_pre_header
                _
              $region78: #{tpu_custom_call.1} parent=75 // loop_header
                %s1200 = sphi 0, %s1202
                %p1201 = scmp.ge.s32.totalorder %s1200, %s1198
                %s1205 = sphi 0, %s1242
                %s1206 = sphi %s1177, %s1245
                %s1207 = sphi %s1188, %s1246
              $region79: #{tpu_custom_call.1} parent=75 // loop_header_branch
                %1204 = sbr.rel (%p1201) target = $region83
              $region80: #{tpu_custom_call.1} parent=75 // loop_body
                %v1208 = vld [vmem:[%s1206] sm:%s1197]
                %1209 = vst [vmem:[%s1207] sm:%s1197] %v1208
                %v1210 = vld [vmem:[%s1206 + $0x8] sm:%s1197]
                %1211 = vst [vmem:[%s1207 + $0x8] sm:%s1197] %v1210
                %v1212 = vld [vmem:[%s1206 + $0x10] sm:%s1197]
                %1213 = vst [vmem:[%s1207 + $0x10] sm:%s1197] %v1212
                %v1214 = vld [vmem:[%s1206 + $0x18] sm:%s1197]
                %1215 = vst [vmem:[%s1207 + $0x18] sm:%s1197] %v1214
                %v1216 = vld [vmem:[%s1206 + $0x20] sm:%s1197]
                %1217 = vst [vmem:[%s1207 + $0x20] sm:%s1197] %v1216
                %v1218 = vld [vmem:[%s1206 + $0x28] sm:%s1197]
                %1219 = vst [vmem:[%s1207 + $0x28] sm:%s1197] %v1218
                %v1220 = vld [vmem:[%s1206 + $0x30] sm:%s1197]
                %1221 = vst [vmem:[%s1207 + $0x30] sm:%s1197] %v1220
                %v1222 = vld [vmem:[%s1206 + $0x38] sm:%s1197]
                %1223 = vst [vmem:[%s1207 + $0x38] sm:%s1197] %v1222
                %v1224 = vld [vmem:[%s1206 + $0x40] sm:%s1197]
                %1225 = vst [vmem:[%s1207 + $0x40] sm:%s1197] %v1224
                %v1226 = vld [vmem:[%s1206 + $0x48] sm:%s1197]
                %1227 = vst [vmem:[%s1207 + $0x48] sm:%s1197] %v1226
                %v1228 = vld [vmem:[%s1206 + $0x50] sm:%s1197]
                %1229 = vst [vmem:[%s1207 + $0x50] sm:%s1197] %v1228
                %v1230 = vld [vmem:[%s1206 + $0x58] sm:%s1197]
                %1231 = vst [vmem:[%s1207 + $0x58] sm:%s1197] %v1230
                %v1232 = vld [vmem:[%s1206 + $0x60] sm:%s1197]
                %1233 = vst [vmem:[%s1207 + $0x60] sm:%s1197] %v1232
                %v1234 = vld [vmem:[%s1206 + $0x68] sm:%s1197]
                %1235 = vst [vmem:[%s1207 + $0x68] sm:%s1197] %v1234
                %v1236 = vld [vmem:[%s1206 + $0x70] sm:%s1197]
                %1237 = vst [vmem:[%s1207 + $0x70] sm:%s1197] %v1236
                %v1238 = vld [vmem:[%s1206 + $0x78] sm:%s1197]
                %1239 = vst [vmem:[%s1207 + $0x78] sm:%s1197] %v1238
                %s1240 = sadd.s32 1, %s1205
                %p1241 = scmp.ge.s32.totalorder %s1240, %s1198
                %s1242 = scalar_select %p1241, 0, %s1240
                %s1243 = smul.u32 %s1242, 128
                %s1244 = smul.u32 %s1242, 128
                %s1245 = scalar_lea.vmem %s1177, %s1243 [#allocation8]
                %s1246 = scalar_lea.vmem %s1188, %s1244
              $region81: #{tpu_custom_call.1} parent=75 // loop_footer
                %s1202 = sadd.s32 %s1200, 1
              $region82: #{tpu_custom_call.1} parent=75 // loop_footer_branch
                %1199 = sbr.rel target = $region78
              $region83: #{tpu_custom_call.1} parent=75 // loop_exit
                _
              %s1247 = sshrl.u32 %s1184, 4
              %s1248 = sand.u32 %s1184, 15
              %s1249 = smul.u32 %s1247, 16
              %s1250 = smul.u32 8, %s1249
              %s1251 = scalar_lea.vmem %s1177, %s1250 [#allocation8]
              %s1252 = smul.u32 8, %s1249
              %s1253 = scalar_lea.vmem %s1188, %s1252
              // While loop
              $region84: #{tpu_custom_call.1} parent=75 // loop_pre_header
                _
              $region85: #{tpu_custom_call.1} parent=75 // loop_header
                %s1255 = sphi 0, %s1257
                %p1256 = scmp.ge.s32.totalorder %s1255, %s1248
                %s1260 = sphi 0, %s1267
                %s1261 = sphi %s1251, %s1270
                %s1262 = sphi %s1253, %s1271
              $region86: #{tpu_custom_call.1} parent=75 // loop_header_branch
                %1259 = sbr.rel (%p1256) target = $region90
              $region87: #{tpu_custom_call.1} parent=75 // loop_body
                %v1263 = vld [vmem:[%s1261] sm:%s1197]
                %1264 = vst [vmem:[%s1262] sm:%s1197] %v1263
                %s1265 = sadd.s32 1, %s1260
                %p1266 = scmp.ge.s32.totalorder %s1265, %s1248
                %s1267 = scalar_select %p1266, 0, %s1265
                %s1268 = smul.u32 %s1267, 8
                %s1269 = smul.u32 %s1267, 8
                %s1270 = scalar_lea.vmem %s1251, %s1268 [#allocation8]
                %s1271 = scalar_lea.vmem %s1253, %s1269
              $region88: #{tpu_custom_call.1} parent=75 // loop_footer
                %s1257 = sadd.s32 %s1255, 1
              $region89: #{tpu_custom_call.1} parent=75 // loop_footer_branch
                %1254 = sbr.rel target = $region85
              $region90: #{tpu_custom_call.1} parent=75 // loop_exit
                _
            $region76: #{tpu_custom_call.1} parent=67 // pred_fallthru
              _
          $region68: #{tpu_custom_call.1} parent=63 // pred_fallthru
            _
          %1350 = vnop
        $region64: #{tpu_custom_call.1} parent=47 // pred_fallthru
          _
      $region48: #{tpu_custom_call.1} parent=5 // pred_fallthru
        _
      %p1351 = scmp.le.s32.totalorder 2, %s18
      // Predicated region
      $region113: #{tpu_custom_call.1} parent=5 // pred_check
        %p1352 = pneg %p1351
      $region114: #{tpu_custom_call.1} parent=5 // pred_check_branch
        %1354 = sbr.rel (%p1352) target = $region116
      $region115: #{tpu_custom_call.1} parent=5 // pred_region
        %s1355 = ssub.s32 %s18, 2
        // Predicated region
        $region117: #{tpu_custom_call.1} parent=115 // pred_check
          %p1356 = pneg %p199
        $region118: #{tpu_custom_call.1} parent=115 // pred_check_branch
          %1358 = sbr.rel (%p1356) target = $region120
        $region119: #{tpu_custom_call.1} parent=115 // pred_region
          %s1359 = sand.u32 %s184, 1
          %s1360 = sand.u32 %s184, 1
          %s1361 = smul.addr %s1360, 128
          %s1362 = scalar_lea.vmem [#allocation8], %s1361
        $region120: #{tpu_custom_call.1} parent=115 // pred_fallthru
          _
      $region116: #{tpu_custom_call.1} parent=5 // pred_fallthru
        _
    $region6: #{tpu_custom_call.1} parent=1 // loop_footer
      %s22 = sadd.s32 1, %s18
    $region7: #{tpu_custom_call.1} parent=1 // loop_footer_branch
      %17 = sbr.rel target = $region3
    $region8: #{tpu_custom_call.1} parent=1 // loop_exit
      _
    %1363 = vsyncpa [#allocation4], 1
    %s1364 = scalar_lea.sflag [#allocation4], 1
    %1365 = vsyncpa %s1364, 1
    %1366 = vsyncpa [#allocation6], 1

</llo_original>
